<compile_context>
chip_gen: v6e
topology: v6e:2x2x1
jax: 0.10.0
libtpu: 0.0.40
codegen_flags: <defaults>
</compile_context>

<pallas_src>
import functools

import jax
import jax.numpy as jnp
from jax.experimental import pallas as pl
from jax.experimental.pallas import tpu as pltpu


def _round_up(x, m):
    return ((x + m - 1) // m) * m


def _mlp_kernel(x_ref, w1_ref, b1_ref, w2_ref, b2_ref, w3_ref, b3_ref, out_ref,
                *, seq_len):
    # x_ref: (TILE_B * S, E_PAD) bf16 rows of the flattened (batch*seq) input.
    x = x_ref[...]

    h = jnp.dot(x, w1_ref[...], preferred_element_type=jnp.float32)
    h = jnp.maximum(h + b1_ref[...], 0.0)

    h = jnp.dot(h.astype(jnp.bfloat16), w2_ref[...],
                preferred_element_type=jnp.float32)
    h = jnp.maximum(h + b2_ref[...], 0.0)

    h = jnp.dot(h.astype(jnp.bfloat16), w3_ref[...],
                preferred_element_type=jnp.float32)
    h = jnp.maximum(h + b3_ref[...], 0.0)            # (TILE_M, OUT_PAD) f32

    tile_m, out_pad = h.shape
    # torch.mean(..., dim=1): group rows back into (TILE_B, S, OUT_PAD) and
    # average over the sequence axis.  Output block is (TILE_B, 128) dense.
    h = h.reshape(tile_m // seq_len, seq_len, out_pad)
    out_ref[...] = jnp.mean(h, axis=1)


@functools.partial(jax.jit, static_argnames=("output_size",))
def mlp_forward(input_ids, emb_table, w1, b1, w2, b2, w3, b3, output_size=1):
    """input_ids: (B, S) int32.  Returns (B, output_size) float32."""
    B, S = input_ids.shape
    E = emb_table.shape[1]
    H1 = w1.shape[1]
    H2 = w2.shape[1]

    LANES = 128
    SUBLANES = 8

    # Lane-align the embedding dim (300 -> 384) and fc3 output dim (1 -> 128).
    E_PAD = _round_up(E, LANES)
    OUT_PAD = LANES

    emb_p = jnp.zeros((emb_table.shape[0], E_PAD), jnp.float32)
    emb_p = emb_p.at[:, :E].set(emb_table.astype(jnp.float32))
    w1p = jnp.zeros((E_PAD, H1), jnp.float32).at[:E, :].set(w1)
    w3p = jnp.zeros((H2, OUT_PAD), jnp.float32).at[:, :output_size].set(w3)
    b3p = jnp.zeros((1, OUT_PAD), jnp.float32).at[:, :output_size].set(
        b3.reshape(1, -1))
    b1r = b1.reshape(1, H1)
    b2r = b2.reshape(1, H2)

    # TODO(synk): embedding gather stays in XLA glue; fusing it into the kernel
    # (scalar-prefetched input_ids + manual DMA gather of emb rows) would remove
    # the (B, S, E) HBM round-trip but needs a manual-DMA kernel.
    x = jnp.take(emb_p, input_ids, axis=0)            # (B, S, E_PAD) f32

    # Row tiling: ~512 activation rows per grid step, TILE_B a multiple of 8 so
    # the (TILE_B, 128) output block is sublane-dense.
    tile_b = min(_round_up(max(SUBLANES, pl.cdiv(512, S)), SUBLANES),
                 _round_up(B, SUBLANES))
    B_pad = _round_up(B, tile_b)
    if B_pad != B:
        x = jnp.pad(x, ((0, B_pad - B), (0, 0), (0, 0)))
    tile_m = tile_b * S

    # Matmul operands in bf16 (f32 accumulation in-kernel).
    x_flat = x.reshape(B_pad * S, E_PAD).astype(jnp.bfloat16)
    w1b = w1p.astype(jnp.bfloat16)
    w2b = w2.astype(jnp.bfloat16)
    w3b = w3p.astype(jnp.bfloat16)

    kernel = functools.partial(_mlp_kernel, seq_len=S)

    out_padded = pl.pallas_call(
        kernel,
        out_shape=jax.ShapeDtypeStruct((B_pad, OUT_PAD), jnp.float32),
        grid_spec=pltpu.PrefetchScalarGridSpec(
            num_scalar_prefetch=0,
            grid=(B_pad // tile_b,),
            in_specs=[
                pl.BlockSpec((tile_m, E_PAD), lambda i: (i, 0)),   # activations
                pl.BlockSpec((E_PAD, H1), lambda i: (0, 0)),       # w1 (padded)
                pl.BlockSpec((1, H1), lambda i: (0, 0)),           # b1
                pl.BlockSpec((H1, H2), lambda i: (0, 0)),          # w2
                pl.BlockSpec((1, H2), lambda i: (0, 0)),           # b2
                pl.BlockSpec((H2, OUT_PAD), lambda i: (0, 0)),     # w3 (padded)
                pl.BlockSpec((1, OUT_PAD), lambda i: (0, 0)),      # b3 (padded)
            ],
            out_specs=pl.BlockSpec((tile_b, OUT_PAD), lambda i: (i, 0)),
        ),
        compiler_params=pltpu.CompilerParams(
            dimension_semantics=("parallel",),
        ),
    )(x_flat, w1b, b1r, w2b, b2r, w3b, b3p)

    return out_padded[:B, :output_size]


def init_params(key, vocab_size, embedding_size=300, output_size=1):
    """Deterministic parameter init (PyTorch-like uniform bounds)."""
    k_emb, k1, k1b, k2, k2b, k3, k3b = jax.random.split(key, 7)

    emb = jax.random.normal(k_emb, (vocab_size + 1, embedding_size), jnp.float32)
    emb = emb.at[0].set(0.0)  # padding_idx=0

    def linear(kw, kb, fan_in, fan_out):
        bound = 1.0 / jnp.sqrt(fan_in)
        w = jax.random.uniform(kw, (fan_in, fan_out), jnp.float32, -bound, bound)
        b = jax.random.uniform(kb, (fan_out,), jnp.float32, -bound, bound)
        return w, b

    w1, b1 = linear(k1, k1b, embedding_size, 512)
    w2, b2 = linear(k2, k2b, 512, 512)
    w3, b3 = linear(k3, k3b, 512, output_size)
    return emb, w1, b1, w2, b2, w3, b3


def _reference_f32(input_ids, emb, w1, b1, w2, b2, w3, b3):
    x = jnp.take(emb, input_ids, axis=0)
    h = jax.nn.relu(x @ w1 + b1)
    h = jax.nn.relu(h @ w2 + b2)
    h = jax.nn.relu(h @ w3 + b3)
    return jnp.mean(h, axis=1)


def _reference_bf16(input_ids, emb, w1, b1, w2, b2, w3, b3):
    # Emulates the kernel's bf16 matmul operands with f32 accumulation.
    x = jnp.take(emb, input_ids, axis=0).astype(jnp.bfloat16)
    h = jax.nn.relu(jnp.dot(x, w1.astype(jnp.bfloat16),
                            preferred_element_type=jnp.float32) + b1)
    h = jax.nn.relu(jnp.dot(h.astype(jnp.bfloat16), w2.astype(jnp.bfloat16),
                            preferred_element_type=jnp.float32) + b2)
    h = jax.nn.relu(jnp.dot(h.astype(jnp.bfloat16), w3.astype(jnp.bfloat16),
                            preferred_element_type=jnp.float32) + b3)
    return jnp.mean(h, axis=1)


if __name__ == "__main__":
    key = jax.random.PRNGKey(0)
    k_params, k_ids = jax.random.split(key)

    VOCAB = 50          # synthetic vocab (real module uses BERT tokenizer vocab)
    B, S = 2, 8
    EMB, OUT = 300, 1

    emb, w1, b1, w2, b2, w3, b3 = init_params(k_params, VOCAB, EMB, OUT)
    input_ids = jax.random.randint(k_ids, (B, S), 0, VOCAB + 1, dtype=jnp.int32)

    out = mlp_forward(input_ids, emb, w1, b1, w2, b2, w3, b3, output_size=OUT)
    out = jax.block_until_ready(out)
    assert out.shape == (B, OUT), out.shape

    ref_bf16 = _reference_bf16(input_ids, emb, w1, b1, w2, b2, w3, b3)
    ref_f32 = _reference_f32(input_ids, emb, w1, b1, w2, b2, w3, b3)
    assert jnp.allclose(out, ref_bf16, atol=2e-3, rtol=2e-3), (out, ref_bf16)
    assert jnp.allclose(out, ref_f32, atol=5e-2, rtol=5e-2), (out, ref_f32)

    print("KERNEL_OK")
</pallas_src>

<mosaic_0001>
module attributes {stable_mosaic.version = 11 : i64} {
  func.func @_mlp_kernel(%arg0: i32, %arg1: memref<64x384xbf16, #tpu.memory_space<vmem>>, %arg2: memref<384x512xbf16, #tpu.memory_space<vmem>>, %arg3: memref<1x512xf32, #tpu.memory_space<vmem>>, %arg4: memref<512x512xbf16, #tpu.memory_space<vmem>>, %arg5: memref<1x512xf32, #tpu.memory_space<vmem>>, %arg6: memref<512x128xbf16, #tpu.memory_space<vmem>>, %arg7: memref<1x128xf32, #tpu.memory_space<vmem>>, %arg8: memref<8x128xf32, #tpu.memory_space<vmem>>) attributes {dimension_semantics = [#tpu.dimension_semantics<parallel>], iteration_bounds = array<i64: 1>, scalar_prefetch = 0 : i64, scratch_operands = 0 : i64, tpu.core_type = #tpu.core_type<tc>, window_params = [{transform_indices = @transform_0, window_bounds = array<i64: 64, 384>}, {pipeline_mode = #tpu.pipeline_mode<synchronous>, transform_indices = @transform_1, window_bounds = array<i64: 384, 512>}, {pipeline_mode = #tpu.pipeline_mode<synchronous>, transform_indices = @transform_2, window_bounds = array<i64: 1, 512>}, {pipeline_mode = #tpu.pipeline_mode<synchronous>, transform_indices = @transform_3, window_bounds = array<i64: 512, 512>}, {pipeline_mode = #tpu.pipeline_mode<synchronous>, transform_indices = @transform_4, window_bounds = array<i64: 1, 512>}, {pipeline_mode = #tpu.pipeline_mode<synchronous>, transform_indices = @transform_5, window_bounds = array<i64: 512, 128>}, {pipeline_mode = #tpu.pipeline_mode<synchronous>, transform_indices = @transform_6, window_bounds = array<i64: 1, 128>}, {transform_indices = @transform_7, window_bounds = array<i64: 8, 128>}]} {
    %c0 = arith.constant 0 : index
    %c0_0 = arith.constant 0 : index
    %0 = vector.load %arg1[%c0, %c0_0] : memref<64x384xbf16, #tpu.memory_space<vmem>>, vector<64x384xbf16>
    %c0_1 = arith.constant 0 : index
    %c0_2 = arith.constant 0 : index
    %1 = vector.load %arg2[%c0_1, %c0_2] : memref<384x512xbf16, #tpu.memory_space<vmem>>, vector<384x512xbf16>
    %cst = arith.constant dense<0.000000e+00> : vector<64x512xf32>
    %2 = tpu.matmul %0, %1, %cst {dimension_numbers = #tpu.dot_dimension_numbers<[1], [0], [0], [1], [0, 0, 1, 1], [], []>} : vector<64x384xbf16>, vector<384x512xbf16>, vector<64x512xf32> -> vector<64x512xf32>
    %c0_3 = arith.constant 0 : index
    %c0_4 = arith.constant 0 : index
    %3 = vector.load %arg3[%c0_3, %c0_4] : memref<1x512xf32, #tpu.memory_space<vmem>>, vector<1x512xf32>
    %4 = vector.broadcast %3 : vector<1x512xf32> to vector<64x512xf32>
    %5 = arith.addf %2, %4 : vector<64x512xf32>
    %cst_5 = arith.constant 0.000000e+00 : f32
    %6 = vector.broadcast %cst_5 : f32 to vector<64x512xf32>
    %7 = arith.maximumf %5, %6 : vector<64x512xf32>
    %8 = arith.truncf %7 : vector<64x512xf32> to vector<64x512xbf16>
    %c0_6 = arith.constant 0 : index
    %c0_7 = arith.constant 0 : index
    %9 = vector.load %arg4[%c0_6, %c0_7] : memref<512x512xbf16, #tpu.memory_space<vmem>>, vector<512x512xbf16>
    %cst_8 = arith.constant dense<0.000000e+00> : vector<64x512xf32>
    %10 = tpu.matmul %8, %9, %cst_8 {dimension_numbers = #tpu.dot_dimension_numbers<[1], [0], [0], [1], [0, 0, 1, 1], [], []>} : vector<64x512xbf16>, vector<512x512xbf16>, vector<64x512xf32> -> vector<64x512xf32>
    %c0_9 = arith.constant 0 : index
    %c0_10 = arith.constant 0 : index
    %11 = vector.load %arg5[%c0_9, %c0_10] : memref<1x512xf32, #tpu.memory_space<vmem>>, vector<1x512xf32>
    %12 = vector.broadcast %11 : vector<1x512xf32> to vector<64x512xf32>
    %13 = arith.addf %10, %12 : vector<64x512xf32>
    %cst_11 = arith.constant 0.000000e+00 : f32
    %14 = vector.broadcast %cst_11 : f32 to vector<64x512xf32>
    %15 = arith.maximumf %13, %14 : vector<64x512xf32>
    %16 = arith.truncf %15 : vector<64x512xf32> to vector<64x512xbf16>
    %c0_12 = arith.constant 0 : index
    %c0_13 = arith.constant 0 : index
    %17 = vector.load %arg6[%c0_12, %c0_13] : memref<512x128xbf16, #tpu.memory_space<vmem>>, vector<512x128xbf16>
    %cst_14 = arith.constant dense<0.000000e+00> : vector<64x128xf32>
    %18 = tpu.matmul %16, %17, %cst_14 {dimension_numbers = #tpu.dot_dimension_numbers<[1], [0], [0], [1], [0, 0, 1, 1], [], []>} : vector<64x512xbf16>, vector<512x128xbf16>, vector<64x128xf32> -> vector<64x128xf32>
    %c0_15 = arith.constant 0 : index
    %c0_16 = arith.constant 0 : index
    %19 = vector.load %arg7[%c0_15, %c0_16] : memref<1x128xf32, #tpu.memory_space<vmem>>, vector<1x128xf32>
    %20 = vector.broadcast %19 : vector<1x128xf32> to vector<64x128xf32>
    %21 = arith.addf %18, %20 : vector<64x128xf32>
    %cst_17 = arith.constant 0.000000e+00 : f32
    %22 = vector.broadcast %cst_17 : f32 to vector<64x128xf32>
    %23 = arith.maximumf %21, %22 : vector<64x128xf32>
    %24 = vector.shape_cast %23 : vector<64x128xf32> to vector<8x8x128xf32>
    %cst_18 = arith.constant dense<0.000000e+00> : vector<8x128xf32>
    %25 = vector.multi_reduction <add>, %24, %cst_18 [1] : vector<8x8x128xf32> to vector<8x128xf32>
    %cst_19 = arith.constant 8.000000e+00 : f32
    %26 = vector.broadcast %cst_19 : f32 to vector<8x128xf32>
    %27 = arith.divf %25, %26 : vector<8x128xf32>
    %c0_20 = arith.constant 0 : index
    %c0_21 = arith.constant 0 : index
    %28 = vector.load %arg8[%c0_20, %c0_21] : memref<8x128xf32, #tpu.memory_space<vmem>>, vector<8x128xf32>
    tpu.vector_store %arg8[%c0_20, %c0_21], %27 {strides = array<i32>} : memref<8x128xf32, #tpu.memory_space<vmem>>, vector<8x128xf32>,
    return
  }
  func.func @transform_0(%arg0: i32) -> (i32, i32) {
    %c0_i32 = arith.constant 0 : i32
    %c0_i32_0 = arith.constant 0 : i32
    return %arg0, %c0_i32 : i32, i32
  }
  func.func @transform_1(%arg0: i32) -> (i32, i32) {
    %c0_i32 = arith.constant 0 : i32
    %c0_i32_0 = arith.constant 0 : i32
    %c0_i32_1 = arith.constant 0 : i32
    return %c0_i32, %c0_i32_0 : i32, i32
  }
  func.func @transform_2(%arg0: i32) -> (i32, i32) {
    %c0_i32 = arith.constant 0 : i32
    %c0_i32_0 = arith.constant 0 : i32
    %c0_i32_1 = arith.constant 0 : i32
    return %c0_i32, %c0_i32_0 : i32, i32
  }
  func.func @transform_3(%arg0: i32) -> (i32, i32) {
    %c0_i32 = arith.constant 0 : i32
    %c0_i32_0 = arith.constant 0 : i32
    %c0_i32_1 = arith.constant 0 : i32
    return %c0_i32, %c0_i32_0 : i32, i32
  }
  func.func @transform_4(%arg0: i32) -> (i32, i32) {
    %c0_i32 = arith.constant 0 : i32
    %c0_i32_0 = arith.constant 0 : i32
    %c0_i32_1 = arith.constant 0 : i32
    return %c0_i32, %c0_i32_0 : i32, i32
  }
  func.func @transform_5(%arg0: i32) -> (i32, i32) {
    %c0_i32 = arith.constant 0 : i32
    %c0_i32_0 = arith.constant 0 : i32
    %c0_i32_1 = arith.constant 0 : i32
    return %c0_i32, %c0_i32_0 : i32, i32
  }
  func.func @transform_6(%arg0: i32) -> (i32, i32) {
    %c0_i32 = arith.constant 0 : i32
    %c0_i32_0 = arith.constant 0 : i32
    %c0_i32_1 = arith.constant 0 : i32
    return %c0_i32, %c0_i32_0 : i32, i32
  }
  func.func @transform_7(%arg0: i32) -> (i32, i32) {
    %c0_i32 = arith.constant 0 : i32
    %c0_i32_0 = arith.constant 0 : i32
    return %arg0, %c0_i32 : i32, i32
  }
}

</mosaic_0001>

<llo_original>
// kernel: mlp_forward.1
$region0: #{mlp_forward.1}
  #allocation0 [shape = 'u32[]', space=smem, size = 0x4, offset = 0x4, fixed_abs, tag = 'smem constant byte address 0x4 - core index']
  #allocation1 [shape = 'u32[144,128]{1,0:T(1,128)}', space=vmem, size = 0x12000, scoped, tag = 'internal scratch']
  %s0 = inlined_call_operand.vmem [shape: bf16[64,384], index: 0, kind: input, shape index: {}]
  %s1 = inlined_call_operand.vmem [shape: bf16[384,512], index: 1, kind: input, shape index: {}]
  %s2 = inlined_call_operand.vmem [shape: f32[1,512], index: 2, kind: input, shape index: {}]
  %s3 = inlined_call_operand.vmem [shape: bf16[512,512], index: 3, kind: input, shape index: {}]
  %s4 = inlined_call_operand.vmem [shape: f32[1,512], index: 4, kind: input, shape index: {}]
  %s5 = inlined_call_operand.vmem [shape: bf16[512,128], index: 5, kind: input, shape index: {}]
  %s6 = inlined_call_operand.vmem [shape: f32[1,128], index: 6, kind: input, shape index: {}]
  %s7 = inlined_call_operand.vmem [shape: f32[8,128], index: 7, kind: output, shape index: {}]
  %s8 = sld [smem:[#allocation0]]
  $region38: #{mlp_forward.1} parent=0
    _
  %s10 = ssub.s32 1, %s8
  %s11 = scalar_select 0, %s10, %s8
  // Predicated region
  $region2: #{mlp_forward.1} parent=0 // pred_check
    _
  $region3: #{mlp_forward.1} parent=0 // pred_check_branch
    %13 = sbr.rel (0) target = $region5
  $region4: #{mlp_forward.1} parent=0 // pred_region
    _
  $region5: #{mlp_forward.1} parent=0 // pred_fallthru
    _
  // Predicated region
  $region6: #{mlp_forward.1} parent=0 // pred_check
    _
  $region7: #{mlp_forward.1} parent=0 // pred_check_branch
    %15 = sbr.rel (0) target = $region9
  $region8: #{mlp_forward.1} parent=0 // pred_region
    _
  $region9: #{mlp_forward.1} parent=0 // pred_fallthru
    _
  // Predicated region
  $region10: #{mlp_forward.1} parent=0 // pred_check
    _
  $region11: #{mlp_forward.1} parent=0 // pred_check_branch
    %17 = sbr.rel (0) target = $region13
  $region12: #{mlp_forward.1} parent=0 // pred_region
    _
  $region13: #{mlp_forward.1} parent=0 // pred_fallthru
    _
  // Predicated region
  $region14: #{mlp_forward.1} parent=0 // pred_check
    _
  $region15: #{mlp_forward.1} parent=0 // pred_check_branch
    %19 = sbr.rel (0) target = $region17
  $region16: #{mlp_forward.1} parent=0 // pred_region
    _
  $region17: #{mlp_forward.1} parent=0 // pred_fallthru
    _
  // Predicated region
  $region18: #{mlp_forward.1} parent=0 // pred_check
    _
  $region19: #{mlp_forward.1} parent=0 // pred_check_branch
    %21 = sbr.rel (0) target = $region21
  $region20: #{mlp_forward.1} parent=0 // pred_region
    _
  $region21: #{mlp_forward.1} parent=0 // pred_fallthru
    _
  // Predicated region
  $region22: #{mlp_forward.1} parent=0 // pred_check
    _
  $region23: #{mlp_forward.1} parent=0 // pred_check_branch
    %23 = sbr.rel (0) target = $region25
  $region24: #{mlp_forward.1} parent=0 // pred_region
    _
  $region25: #{mlp_forward.1} parent=0 // pred_fallthru
    _
  // Predicated region
  $region26: #{mlp_forward.1} parent=0 // pred_check
    _
  $region27: #{mlp_forward.1} parent=0 // pred_check_branch
    %25 = sbr.rel (0) target = $region29
  $region28: #{mlp_forward.1} parent=0 // pred_region
    _
  $region29: #{mlp_forward.1} parent=0 // pred_fallthru
    _
  %v27 = vld [vmem:[%s0] sm:$0xff]
  %v28 = vld [vmem:[%s0 + $0x8] sm:$0xf]
  %v29 = vld [vmem:[%s0 + $0xc] sm:$0xff]
  %v30 = vld [vmem:[%s0 + $0x14] sm:$0xf]
  %v31 = vld [vmem:[%s0 + $0x18] sm:$0xff]
  %v32 = vld [vmem:[%s0 + $0x20] sm:$0xf]
  %v33 = vld [vmem:[%s0 + $0x24] sm:$0xff]
  %v34 = vld [vmem:[%s0 + $0x2c] sm:$0xf]
  %v35 = vld [vmem:[%s0 + $0x30] sm:$0xff]
  %v36 = vld [vmem:[%s0 + $0x38] sm:$0xf]
  %v37 = vld [vmem:[%s0 + $0x3c] sm:$0xff]
  %v38 = vld [vmem:[%s0 + $0x44] sm:$0xf]
  %v39 = vld [vmem:[%s0 + $0x48] sm:$0xff]
  %v40 = vld [vmem:[%s0 + $0x50] sm:$0xf]
  %v41 = vld [vmem:[%s0 + $0x54] sm:$0xff]
  %v42 = vld [vmem:[%s0 + $0x5c] sm:$0xf]
  %v43 = vld [vmem:[%s1] sm:$0xff]
  %v44 = vld [vmem:[%s1 + $0x8] sm:$0xff]
  %v45 = vld [vmem:[%s1 + $0x10] sm:$0xff]
  %v46 = vld [vmem:[%s1 + $0x18] sm:$0xff]
  %v47 = vld [vmem:[%s1 + $0x20] sm:$0xff]
  %v48 = vld [vmem:[%s1 + $0x28] sm:$0xff]
  %v49 = vld [vmem:[%s1 + $0x30] sm:$0xff]
  %v50 = vld [vmem:[%s1 + $0x38] sm:$0xff]
  %v51 = vld [vmem:[%s1 + $0x40] sm:$0xff]
  %v52 = vld [vmem:[%s1 + $0x48] sm:$0xff]
  %v53 = vld [vmem:[%s1 + $0x50] sm:$0xff]
  %v54 = vld [vmem:[%s1 + $0x58] sm:$0xff]
  %v55 = vld [vmem:[%s1 + $0x60] sm:$0xff]
  %v56 = vld [vmem:[%s1 + $0x68] sm:$0xff]
  %v57 = vld [vmem:[%s1 + $0x70] sm:$0xff]
  %v58 = vld [vmem:[%s1 + $0x78] sm:$0xff]
  %v59 = vld [vmem:[%s1 + $0x80] sm:$0xff]
  %v60 = vld [vmem:[%s1 + $0x88] sm:$0xff]
  %v61 = vld [vmem:[%s1 + $0x90] sm:$0xff]
  %v62 = vld [vmem:[%s1 + $0x98] sm:$0xff]
  %v63 = vld [vmem:[%s1 + $0xa0] sm:$0xff]
  %v64 = vld [vmem:[%s1 + $0xa8] sm:$0xff]
  %v65 = vld [vmem:[%s1 + $0xb0] sm:$0xff]
  %v66 = vld [vmem:[%s1 + $0xb8] sm:$0xff]
  %v67 = vld [vmem:[%s1 + $0xc0] sm:$0xff]
  %v68 = vld [vmem:[%s1 + $0xc8] sm:$0xff]
  %v69 = vld [vmem:[%s1 + $0xd0] sm:$0xff]
  %v70 = vld [vmem:[%s1 + $0xd8] sm:$0xff]
  %v71 = vld [vmem:[%s1 + $0xe0] sm:$0xff]
  %v72 = vld [vmem:[%s1 + $0xe8] sm:$0xff]
  %v73 = vld [vmem:[%s1 + $0xf0] sm:$0xff]
  %v74 = vld [vmem:[%s1 + $0xf8] sm:$0xff]
  %v75 = vld [vmem:[%s1 + $0x100] sm:$0xff]
  %v76 = vld [vmem:[%s1 + $0x108] sm:$0xff]
  %v77 = vld [vmem:[%s1 + $0x110] sm:$0xff]
  %v78 = vld [vmem:[%s1 + $0x118] sm:$0xff]
  %v79 = vld [vmem:[%s1 + $0x120] sm:$0xff]
  %v80 = vld [vmem:[%s1 + $0x128] sm:$0xff]
  %v81 = vld [vmem:[%s1 + $0x130] sm:$0xff]
  %v82 = vld [vmem:[%s1 + $0x138] sm:$0xff]
  %v83 = vld [vmem:[%s1 + $0x140] sm:$0xff]
  %v84 = vld [vmem:[%s1 + $0x148] sm:$0xff]
  %v85 = vld [vmem:[%s1 + $0x150] sm:$0xff]
  %v86 = vld [vmem:[%s1 + $0x158] sm:$0xff]
  %v87 = vld [vmem:[%s1 + $0x160] sm:$0xff]
  %v88 = vld [vmem:[%s1 + $0x168] sm:$0xff]
  %v89 = vld [vmem:[%s1 + $0x170] sm:$0xff]
  %v90 = vld [vmem:[%s1 + $0x178] sm:$0xff]
  %v91 = vld [vmem:[%s1 + $0x180] sm:$0xff]
  %v92 = vld [vmem:[%s1 + $0x188] sm:$0xff]
  %v93 = vld [vmem:[%s1 + $0x190] sm:$0xff]
  %v94 = vld [vmem:[%s1 + $0x198] sm:$0xff]
  %v95 = vld [vmem:[%s1 + $0x1a0] sm:$0xff]
  %v96 = vld [vmem:[%s1 + $0x1a8] sm:$0xff]
  %v97 = vld [vmem:[%s1 + $0x1b0] sm:$0xff]
  %v98 = vld [vmem:[%s1 + $0x1b8] sm:$0xff]
  %v99 = vld [vmem:[%s1 + $0x1c0] sm:$0xff]
  %v100 = vld [vmem:[%s1 + $0x1c8] sm:$0xff]
  %v101 = vld [vmem:[%s1 + $0x1d0] sm:$0xff]
  %v102 = vld [vmem:[%s1 + $0x1d8] sm:$0xff]
  %v103 = vld [vmem:[%s1 + $0x1e0] sm:$0xff]
  %v104 = vld [vmem:[%s1 + $0x1e8] sm:$0xff]
  %v105 = vld [vmem:[%s1 + $0x1f0] sm:$0xff]
  %v106 = vld [vmem:[%s1 + $0x1f8] sm:$0xff]
  %v107 = vld [vmem:[%s1 + $0x200] sm:$0xff]
  %v108 = vld [vmem:[%s1 + $0x208] sm:$0xff]
  %v109 = vld [vmem:[%s1 + $0x210] sm:$0xff]
  %v110 = vld [vmem:[%s1 + $0x218] sm:$0xff]
  %v111 = vld [vmem:[%s1 + $0x220] sm:$0xff]
  %v112 = vld [vmem:[%s1 + $0x228] sm:$0xff]
  %v113 = vld [vmem:[%s1 + $0x230] sm:$0xff]
  %v114 = vld [vmem:[%s1 + $0x238] sm:$0xff]
  %v115 = vld [vmem:[%s1 + $0x240] sm:$0xff]
  %v116 = vld [vmem:[%s1 + $0x248] sm:$0xff]
  %v117 = vld [vmem:[%s1 + $0x250] sm:$0xff]
  %v118 = vld [vmem:[%s1 + $0x258] sm:$0xff]
  %v119 = vld [vmem:[%s1 + $0x260] sm:$0xff]
  %v120 = vld [vmem:[%s1 + $0x268] sm:$0xff]
  %v121 = vld [vmem:[%s1 + $0x270] sm:$0xff]
  %v122 = vld [vmem:[%s1 + $0x278] sm:$0xff]
  %v123 = vld [vmem:[%s1 + $0x280] sm:$0xff]
  %v124 = vld [vmem:[%s1 + $0x288] sm:$0xff]
  %v125 = vld [vmem:[%s1 + $0x290] sm:$0xff]
  %v126 = vld [vmem:[%s1 + $0x298] sm:$0xff]
  %v127 = vld [vmem:[%s1 + $0x2a0] sm:$0xff]
  %v128 = vld [vmem:[%s1 + $0x2a8] sm:$0xff]
  %v129 = vld [vmem:[%s1 + $0x2b0] sm:$0xff]
  %v130 = vld [vmem:[%s1 + $0x2b8] sm:$0xff]
  %v131 = vld [vmem:[%s1 + $0x2c0] sm:$0xff]
  %v132 = vld [vmem:[%s1 + $0x2c8] sm:$0xff]
  %v133 = vld [vmem:[%s1 + $0x2d0] sm:$0xff]
  %v134 = vld [vmem:[%s1 + $0x2d8] sm:$0xff]
  %v135 = vld [vmem:[%s1 + $0x2e0] sm:$0xff]
  %v136 = vld [vmem:[%s1 + $0x2e8] sm:$0xff]
  %v137 = vld [vmem:[%s1 + $0x2f0] sm:$0xff]
  %v138 = vld [vmem:[%s1 + $0x2f8] sm:$0xff]
  %v139 = vld [vmem:[%s2] sm:$0xf]
  %v141 = vlaneseq
  %v142 = vshrl.u32 %v141, 7
  %v143 = vsub.s32 0, %v142
  %v144 = vrot.slane %v139, %v143
  %v145 = vlaneseq
  %v146 = vshrl.u32 %v145, 7
  %v147 = vsub.s32 1, %v146
  %v148 = vrot.slane %v139, %v147
  %v149 = vlaneseq
  %v150 = vshrl.u32 %v149, 7
  %v151 = vsub.s32 2, %v150
  %v152 = vrot.slane %v139, %v151
  %v153 = vlaneseq
  %v154 = vshrl.u32 %v153, 7
  %v155 = vsub.s32 3, %v154
  %v156 = vrot.slane %v139, %v155
  %v177 = vunpack.c.l.b16 %v27
  %v178 = vunpack.c.h.b16 %v27
  %v179 = vunpack.c.l.b16 %v28
  %v180 = vunpack.c.l.b16 %v29
  %v181 = vunpack.c.h.b16 %v29
  %v182 = vunpack.c.l.b16 %v30
  %v183 = vunpack.c.l.b16 %v31
  %v184 = vunpack.c.h.b16 %v31
  %v185 = vunpack.c.l.b16 %v32
  %v186 = vunpack.c.l.b16 %v33
  %v187 = vunpack.c.h.b16 %v33
  %v188 = vunpack.c.l.b16 %v34
  %v189 = vunpack.c.l.b16 %v35
  %v190 = vunpack.c.h.b16 %v35
  %v191 = vunpack.c.l.b16 %v36
  %v192 = vunpack.c.l.b16 %v37
  %v193 = vunpack.c.h.b16 %v37
  %v194 = vunpack.c.l.b16 %v38
  %v195 = vunpack.c.l.b16 %v39
  %v196 = vunpack.c.h.b16 %v39
  %v197 = vunpack.c.l.b16 %v40
  %v198 = vunpack.c.l.b16 %v41
  %v199 = vunpack.c.h.b16 %v41
  %v200 = vunpack.c.l.b16 %v42
  %v201 = vpack.c.b16 %v180, %v177
  %v202 = vpack.c.b16 %v181, %v178
  %v203 = vpack.c.b16 %v182, %v179
  %v204 = vpack.c.b16 %v186, %v183
  %v205 = vpack.c.b16 %v187, %v184
  %v206 = vpack.c.b16 %v188, %v185
  %v207 = vpack.c.b16 %v192, %v189
  %v208 = vpack.c.b16 %v193, %v190
  %v209 = vpack.c.b16 %v194, %v191
  %v210 = vpack.c.b16 %v198, %v195
  %v211 = vpack.c.b16 %v199, %v196
  %v212 = vpack.c.b16 %v200, %v197
  %v321 = vunpack.c.l.b16 %v43
  %v322 = vunpack.c.h.b16 %v43
  %v323 = vunpack.c.l.b16 %v44
  %v324 = vunpack.c.h.b16 %v44
  %v325 = vunpack.c.l.b16 %v45
  %v326 = vunpack.c.h.b16 %v45
  %v327 = vunpack.c.l.b16 %v46
  %v328 = vunpack.c.h.b16 %v46
  %v329 = vunpack.c.l.b16 %v47
  %v330 = vunpack.c.h.b16 %v47
  %v331 = vunpack.c.l.b16 %v48
  %v332 = vunpack.c.h.b16 %v48
  %v333 = vunpack.c.l.b16 %v49
  %v334 = vunpack.c.h.b16 %v49
  %v335 = vunpack.c.l.b16 %v50
  %v336 = vunpack.c.h.b16 %v50
  %v337 = vunpack.c.l.b16 %v51
  %v338 = vunpack.c.h.b16 %v51
  %v339 = vunpack.c.l.b16 %v52
  %v340 = vunpack.c.h.b16 %v52
  %v341 = vunpack.c.l.b16 %v53
  %v342 = vunpack.c.h.b16 %v53
  %v343 = vunpack.c.l.b16 %v54
  %v344 = vunpack.c.h.b16 %v54
  %v345 = vunpack.c.l.b16 %v55
  %v346 = vunpack.c.h.b16 %v55
  %v347 = vunpack.c.l.b16 %v56
  %v348 = vunpack.c.h.b16 %v56
  %v349 = vunpack.c.l.b16 %v57
  %v350 = vunpack.c.h.b16 %v57
  %v351 = vunpack.c.l.b16 %v58
  %v352 = vunpack.c.h.b16 %v58
  %v353 = vunpack.c.l.b16 %v59
  %v354 = vunpack.c.h.b16 %v59
  %v355 = vunpack.c.l.b16 %v60
  %v356 = vunpack.c.h.b16 %v60
  %v357 = vunpack.c.l.b16 %v61
  %v358 = vunpack.c.h.b16 %v61
  %v359 = vunpack.c.l.b16 %v62
  %v360 = vunpack.c.h.b16 %v62
  %v361 = vunpack.c.l.b16 %v63
  %v362 = vunpack.c.h.b16 %v63
  %v363 = vunpack.c.l.b16 %v64
  %v364 = vunpack.c.h.b16 %v64
  %v365 = vunpack.c.l.b16 %v65
  %v366 = vunpack.c.h.b16 %v65
  %v367 = vunpack.c.l.b16 %v66
  %v368 = vunpack.c.h.b16 %v66
  %v369 = vunpack.c.l.b16 %v67
  %v370 = vunpack.c.h.b16 %v67
  %v371 = vunpack.c.l.b16 %v68
  %v372 = vunpack.c.h.b16 %v68
  %v373 = vunpack.c.l.b16 %v69
  %v374 = vunpack.c.h.b16 %v69
  %v375 = vunpack.c.l.b16 %v70
  %v376 = vunpack.c.h.b16 %v70
  %v377 = vunpack.c.l.b16 %v71
  %v378 = vunpack.c.h.b16 %v71
  %v379 = vunpack.c.l.b16 %v72
  %v380 = vunpack.c.h.b16 %v72
  %v381 = vunpack.c.l.b16 %v73
  %v382 = vunpack.c.h.b16 %v73
  %v383 = vunpack.c.l.b16 %v74
  %v384 = vunpack.c.h.b16 %v74
  %v385 = vunpack.c.l.b16 %v75
  %v386 = vunpack.c.h.b16 %v75
  %v387 = vunpack.c.l.b16 %v76
  %v388 = vunpack.c.h.b16 %v76
  %v389 = vunpack.c.l.b16 %v77
  %v390 = vunpack.c.h.b16 %v77
  %v391 = vunpack.c.l.b16 %v78
  %v392 = vunpack.c.h.b16 %v78
  %v393 = vunpack.c.l.b16 %v79
  %v394 = vunpack.c.h.b16 %v79
  %v395 = vunpack.c.l.b16 %v80
  %v396 = vunpack.c.h.b16 %v80
  %v397 = vunpack.c.l.b16 %v81
  %v398 = vunpack.c.h.b16 %v81
  %v399 = vunpack.c.l.b16 %v82
  %v400 = vunpack.c.h.b16 %v82
  %v401 = vunpack.c.l.b16 %v83
  %v402 = vunpack.c.h.b16 %v83
  %v403 = vunpack.c.l.b16 %v84
  %v404 = vunpack.c.h.b16 %v84
  %v405 = vunpack.c.l.b16 %v85
  %v406 = vunpack.c.h.b16 %v85
  %v407 = vunpack.c.l.b16 %v86
  %v408 = vunpack.c.h.b16 %v86
  %v409 = vunpack.c.l.b16 %v87
  %v410 = vunpack.c.h.b16 %v87
  %v411 = vunpack.c.l.b16 %v88
  %v412 = vunpack.c.h.b16 %v88
  %v413 = vunpack.c.l.b16 %v89
  %v414 = vunpack.c.h.b16 %v89
  %v415 = vunpack.c.l.b16 %v90
  %v416 = vunpack.c.h.b16 %v90
  %v417 = vunpack.c.l.b16 %v91
  %v418 = vunpack.c.h.b16 %v91
  %v419 = vunpack.c.l.b16 %v92
  %v420 = vunpack.c.h.b16 %v92
  %v421 = vunpack.c.l.b16 %v93
  %v422 = vunpack.c.h.b16 %v93
  %v423 = vunpack.c.l.b16 %v94
  %v424 = vunpack.c.h.b16 %v94
  %v425 = vunpack.c.l.b16 %v95
  %v426 = vunpack.c.h.b16 %v95
  %v427 = vunpack.c.l.b16 %v96
  %v428 = vunpack.c.h.b16 %v96
  %v429 = vunpack.c.l.b16 %v97
  %v430 = vunpack.c.h.b16 %v97
  %v431 = vunpack.c.l.b16 %v98
  %v432 = vunpack.c.h.b16 %v98
  %v433 = vunpack.c.l.b16 %v99
  %v434 = vunpack.c.h.b16 %v99
  %v435 = vunpack.c.l.b16 %v100
  %v436 = vunpack.c.h.b16 %v100
  %v437 = vunpack.c.l.b16 %v101
  %v438 = vunpack.c.h.b16 %v101
  %v439 = vunpack.c.l.b16 %v102
  %v440 = vunpack.c.h.b16 %v102
  %v441 = vunpack.c.l.b16 %v103
  %v442 = vunpack.c.h.b16 %v103
  %v443 = vunpack.c.l.b16 %v104
  %v444 = vunpack.c.h.b16 %v104
  %v445 = vunpack.c.l.b16 %v105
  %v446 = vunpack.c.h.b16 %v105
  %v447 = vunpack.c.l.b16 %v106
  %v448 = vunpack.c.h.b16 %v106
  %v449 = vunpack.c.l.b16 %v107
  %v450 = vunpack.c.h.b16 %v107
  %v451 = vunpack.c.l.b16 %v108
  %v452 = vunpack.c.h.b16 %v108
  %v453 = vunpack.c.l.b16 %v109
  %v454 = vunpack.c.h.b16 %v109
  %v455 = vunpack.c.l.b16 %v110
  %v456 = vunpack.c.h.b16 %v110
  %v457 = vunpack.c.l.b16 %v111
  %v458 = vunpack.c.h.b16 %v111
  %v459 = vunpack.c.l.b16 %v112
  %v460 = vunpack.c.h.b16 %v112
  %v461 = vunpack.c.l.b16 %v113
  %v462 = vunpack.c.h.b16 %v113
  %v463 = vunpack.c.l.b16 %v114
  %v464 = vunpack.c.h.b16 %v114
  %v465 = vunpack.c.l.b16 %v115
  %v466 = vunpack.c.h.b16 %v115
  %v467 = vunpack.c.l.b16 %v116
  %v468 = vunpack.c.h.b16 %v116
  %v469 = vunpack.c.l.b16 %v117
  %v470 = vunpack.c.h.b16 %v117
  %v471 = vunpack.c.l.b16 %v118
  %v472 = vunpack.c.h.b16 %v118
  %v473 = vunpack.c.l.b16 %v119
  %v474 = vunpack.c.h.b16 %v119
  %v475 = vunpack.c.l.b16 %v120
  %v476 = vunpack.c.h.b16 %v120
  %v477 = vunpack.c.l.b16 %v121
  %v478 = vunpack.c.h.b16 %v121
  %v479 = vunpack.c.l.b16 %v122
  %v480 = vunpack.c.h.b16 %v122
  %v481 = vunpack.c.l.b16 %v123
  %v482 = vunpack.c.h.b16 %v123
  %v483 = vunpack.c.l.b16 %v124
  %v484 = vunpack.c.h.b16 %v124
  %v485 = vunpack.c.l.b16 %v125
  %v486 = vunpack.c.h.b16 %v125
  %v487 = vunpack.c.l.b16 %v126
  %v488 = vunpack.c.h.b16 %v126
  %v489 = vunpack.c.l.b16 %v127
  %v490 = vunpack.c.h.b16 %v127
  %v491 = vunpack.c.l.b16 %v128
  %v492 = vunpack.c.h.b16 %v128
  %v493 = vunpack.c.l.b16 %v129
  %v494 = vunpack.c.h.b16 %v129
  %v495 = vunpack.c.l.b16 %v130
  %v496 = vunpack.c.h.b16 %v130
  %v497 = vunpack.c.l.b16 %v131
  %v498 = vunpack.c.h.b16 %v131
  %v499 = vunpack.c.l.b16 %v132
  %v500 = vunpack.c.h.b16 %v132
  %v501 = vunpack.c.l.b16 %v133
  %v502 = vunpack.c.h.b16 %v133
  %v503 = vunpack.c.l.b16 %v134
  %v504 = vunpack.c.h.b16 %v134
  %v505 = vunpack.c.l.b16 %v135
  %v506 = vunpack.c.h.b16 %v135
  %v507 = vunpack.c.l.b16 %v136
  %v508 = vunpack.c.h.b16 %v136
  %v509 = vunpack.c.l.b16 %v137
  %v510 = vunpack.c.h.b16 %v137
  %v511 = vunpack.c.l.b16 %v138
  %v512 = vunpack.c.h.b16 %v138
  %v513 = vpack.c.b16 %v325, %v321
  %v514 = vpack.c.b16 %v326, %v322
  %v515 = vpack.c.b16 %v327, %v323
  %v516 = vpack.c.b16 %v328, %v324
  %v517 = vpack.c.b16 %v333, %v329
  %v518 = vpack.c.b16 %v334, %v330
  %v519 = vpack.c.b16 %v335, %v331
  %v520 = vpack.c.b16 %v336, %v332
  %v521 = vpack.c.b16 %v341, %v337
  %v522 = vpack.c.b16 %v342, %v338
  %v523 = vpack.c.b16 %v343, %v339
  %v524 = vpack.c.b16 %v344, %v340
  %v525 = vpack.c.b16 %v349, %v345
  %v526 = vpack.c.b16 %v350, %v346
  %v527 = vpack.c.b16 %v351, %v347
  %v528 = vpack.c.b16 %v352, %v348
  %v529 = vpack.c.b16 %v357, %v353
  %v530 = vpack.c.b16 %v358, %v354
  %v531 = vpack.c.b16 %v359, %v355
  %v532 = vpack.c.b16 %v360, %v356
  %v533 = vpack.c.b16 %v365, %v361
  %v534 = vpack.c.b16 %v366, %v362
  %v535 = vpack.c.b16 %v367, %v363
  %v536 = vpack.c.b16 %v368, %v364
  %v537 = vpack.c.b16 %v373, %v369
  %v538 = vpack.c.b16 %v374, %v370
  %v539 = vpack.c.b16 %v375, %v371
  %v540 = vpack.c.b16 %v376, %v372
  %v541 = vpack.c.b16 %v381, %v377
  %v542 = vpack.c.b16 %v382, %v378
  %v543 = vpack.c.b16 %v383, %v379
  %v544 = vpack.c.b16 %v384, %v380
  %v545 = vpack.c.b16 %v389, %v385
  %v546 = vpack.c.b16 %v390, %v386
  %v547 = vpack.c.b16 %v391, %v387
  %v548 = vpack.c.b16 %v392, %v388
  %v549 = vpack.c.b16 %v397, %v393
  %v550 = vpack.c.b16 %v398, %v394
  %v551 = vpack.c.b16 %v399, %v395
  %v552 = vpack.c.b16 %v400, %v396
  %v553 = vpack.c.b16 %v405, %v401
  %v554 = vpack.c.b16 %v406, %v402
  %v555 = vpack.c.b16 %v407, %v403
  %v556 = vpack.c.b16 %v408, %v404
  %v557 = vpack.c.b16 %v413, %v409
  %v558 = vpack.c.b16 %v414, %v410
  %v559 = vpack.c.b16 %v415, %v411
  %v560 = vpack.c.b16 %v416, %v412
  %v561 = vpack.c.b16 %v421, %v417
  %v562 = vpack.c.b16 %v422, %v418
  %v563 = vpack.c.b16 %v423, %v419
  %v564 = vpack.c.b16 %v424, %v420
  %v565 = vpack.c.b16 %v429, %v425
  %v566 = vpack.c.b16 %v430, %v426
  %v567 = vpack.c.b16 %v431, %v427
  %v568 = vpack.c.b16 %v432, %v428
  %v569 = vpack.c.b16 %v437, %v433
  %v570 = vpack.c.b16 %v438, %v434
  %v571 = vpack.c.b16 %v439, %v435
  %v572 = vpack.c.b16 %v440, %v436
  %v573 = vpack.c.b16 %v445, %v441
  %v574 = vpack.c.b16 %v446, %v442
  %v575 = vpack.c.b16 %v447, %v443
  %v576 = vpack.c.b16 %v448, %v444
  %v577 = vpack.c.b16 %v453, %v449
  %v578 = vpack.c.b16 %v454, %v450
  %v579 = vpack.c.b16 %v455, %v451
  %v580 = vpack.c.b16 %v456, %v452
  %v581 = vpack.c.b16 %v461, %v457
  %v582 = vpack.c.b16 %v462, %v458
  %v583 = vpack.c.b16 %v463, %v459
  %v584 = vpack.c.b16 %v464, %v460
  %v585 = vpack.c.b16 %v469, %v465
  %v586 = vpack.c.b16 %v470, %v466
  %v587 = vpack.c.b16 %v471, %v467
  %v588 = vpack.c.b16 %v472, %v468
  %v589 = vpack.c.b16 %v477, %v473
  %v590 = vpack.c.b16 %v478, %v474
  %v591 = vpack.c.b16 %v479, %v475
  %v592 = vpack.c.b16 %v480, %v476
  %v593 = vpack.c.b16 %v485, %v481
  %v594 = vpack.c.b16 %v486, %v482
  %v595 = vpack.c.b16 %v487, %v483
  %v596 = vpack.c.b16 %v488, %v484
  %v597 = vpack.c.b16 %v493, %v489
  %v598 = vpack.c.b16 %v494, %v490
  %v599 = vpack.c.b16 %v495, %v491
  %v600 = vpack.c.b16 %v496, %v492
  %v601 = vpack.c.b16 %v501, %v497
  %v602 = vpack.c.b16 %v502, %v498
  %v603 = vpack.c.b16 %v503, %v499
  %v604 = vpack.c.b16 %v504, %v500
  %v605 = vpack.c.b16 %v509, %v505
  %v606 = vpack.c.b16 %v510, %v506
  %v607 = vpack.c.b16 %v511, %v507
  %v608 = vpack.c.b16 %v512, %v508
  %705 = vmatprep.subr.bf16.mxu0 %v542
  %706 = vmatpush1.bf16.msra.mxu0 %v541
  %707 = vmatprep.subr.bf16.mxu0 %v538
  %708 = vmatpush1.bf16.msra.mxu0 %v537
  %709 = vmatprep.subr.bf16.mxu0 %v534
  %710 = vmatpush1.bf16.msra.mxu0 %v533
  %711 = vmatprep.subr.bf16.mxu0 %v530
  %712 = vmatpush1.bf16.msra.mxu0 %v529
  %713 = vmatprep.subr.bf16.mxu0 %v526
  %714 = vmatpush1.bf16.msra.mxu0 %v525
  %715 = vmatprep.subr.bf16.mxu0 %v522
  %716 = vmatpush1.bf16.msra.mxu0 %v521
  %717 = vmatprep.subr.bf16.mxu0 %v518
  %718 = vmatpush1.bf16.msra.mxu0 %v517
  %719 = vmatprep.subr.bf16.mxu0 %v514
  %720 = vmatpush1.bf16.msra.mxu0 %v513
  %721 = vmatprep.subr.bf16.mxu0 %v574
  %722 = vmatpush2.bf16.msra.mxu0 %v573
  %723 = vmatprep.subr.bf16.mxu0 %v570
  %724 = vmatpush2.bf16.msra.mxu0 %v569
  %725 = vmatprep.subr.bf16.mxu0 %v566
  %726 = vmatpush2.bf16.msra.mxu0 %v565
  %727 = vmatprep.subr.bf16.mxu0 %v562
  %728 = vmatpush2.bf16.msra.mxu0 %v561
  %729 = vmatprep.subr.bf16.mxu0 %v558
  %730 = vmatpush2.bf16.msra.mxu0 %v557
  %731 = vmatprep.subr.bf16.mxu0 %v554
  %732 = vmatpush2.bf16.msra.mxu0 %v553
  %733 = vmatprep.subr.bf16.mxu0 %v550
  %734 = vmatpush2.bf16.msra.mxu0 %v549
  %735 = vmatprep.subr.bf16.mxu0 %v546
  %736 = vmatpush2.bf16.msra.mxu0 %v545
  %737 = vmatprep.mubr.bf16.mxu0 %v202
  %738 = vmatmul.mubr.bf16.gmra.mxu0 %v201
  %v739 = vpop.f32.mrf.mxu0
  %v740 = vadd.f32 %v144, %v739
  %v741 = vpop.f32.mrf.mxu0
  %v742 = vadd.f32 %v148, %v741
  %v743 = vpop.f32.mrf.mxu0
  %v744 = vadd.f32 %v144, %v743
  %v745 = vpop.f32.mrf.mxu0
  %v746 = vadd.f32 %v148, %v745
  %747 = vmatprep.mubr.bf16.mxu0 %v205
  %748 = vmatmul.mubr.bf16.gmra.mxu0 %v204
  %v749 = vpop.f32.mrf.mxu0
  %v750 = vadd.f32 %v144, %v749
  %v751 = vpop.f32.mrf.mxu0
  %v752 = vadd.f32 %v148, %v751
  %v753 = vpop.f32.mrf.mxu0
  %v754 = vadd.f32 %v144, %v753
  %v755 = vpop.f32.mrf.mxu0
  %v756 = vadd.f32 %v148, %v755
  %757 = vmatprep.mubr.bf16.mxu0 %v208
  %758 = vmatmul.mubr.bf16.gmra.mxu0 %v207
  %v759 = vpop.f32.mrf.mxu0
  %v760 = vadd.f32 %v144, %v759
  %v761 = vpop.f32.mrf.mxu0
  %v762 = vadd.f32 %v148, %v761
  %v763 = vpop.f32.mrf.mxu0
  %v764 = vadd.f32 %v144, %v763
  %v765 = vpop.f32.mrf.mxu0
  %v766 = vadd.f32 %v148, %v765
  %767 = vmatprep.mubr.bf16.mxu0 %v211
  %768 = vmatmul.mubr.bf16.gmra.mxu0 %v210
  %v769 = vpop.f32.mrf.mxu0
  %v770 = vadd.f32 %v144, %v769
  %v771 = vpop.f32.mrf.mxu0
  %v772 = vadd.f32 %v148, %v771
  %v773 = vpop.f32.mrf.mxu0
  %v774 = vadd.f32 %v144, %v773
  %v775 = vpop.f32.mrf.mxu0
  %v776 = vadd.f32 %v148, %v775
  %777 = vdwg.mxu0
  %778 = vmatprep.subr.bf16.mxu0 %v606
  %779 = vmatpush1.bf16.msra.mxu0 %v605
  %780 = vmatprep.subr.bf16.mxu0 %v602
  %781 = vmatpush1.bf16.msra.mxu0 %v601
  %782 = vmatprep.subr.bf16.mxu0 %v598
  %783 = vmatpush1.bf16.msra.mxu0 %v597
  %784 = vmatprep.subr.bf16.mxu0 %v594
  %785 = vmatpush1.bf16.msra.mxu0 %v593
  %786 = vmatprep.subr.bf16.mxu0 %v590
  %787 = vmatpush1.bf16.msra.mxu0 %v589
  %788 = vmatprep.subr.bf16.mxu0 %v586
  %789 = vmatpush1.bf16.msra.mxu0 %v585
  %790 = vmatprep.subr.bf16.mxu0 %v582
  %791 = vmatpush1.bf16.msra.mxu0 %v581
  %792 = vmatprep.subr.bf16.mxu0 %v578
  %793 = vmatpush1.bf16.msra.mxu0 %v577
  %794 = vmatprep.subr.bf16.mxu0 0
  %795 = vmatpush2.bf16.msra.mxu0 0
  %796 = vmatprep.subr.bf16.mxu0 0
  %797 = vmatpush2.bf16.msra.mxu0 0
  %798 = vmatprep.subr.bf16.mxu0 0
  %799 = vmatpush2.bf16.msra.mxu0 0
  %800 = vmatprep.subr.bf16.mxu0 0
  %801 = vmatpush2.bf16.msra.mxu0 0
  %802 = vmatprep.subr.bf16.mxu0 0
  %803 = vmatpush2.bf16.msra.mxu0 0
  %804 = vmatprep.subr.bf16.mxu0 0
  %805 = vmatpush2.bf16.msra.mxu0 0
  %806 = vmatprep.subr.bf16.mxu0 0
  %807 = vmatpush2.bf16.msra.mxu0 0
  %808 = vmatprep.subr.bf16.mxu0 0
  %809 = vmatpush2.bf16.msra.mxu0 0
  %810 = vmatprep.mubr.bf16.mxu0 0
  %811 = vmatmul.mubr.bf16.gmra.mxu0 %v203
  %v812 = vpop.f32.mrf.mxu0
  %v813 = vadd.f32 %v740, %v812
  %v814 = vpop.f32.mrf.mxu0
  %v815 = vadd.f32 %v742, %v814
  %v816 = vpop.f32.mrf.mxu0
  %v817 = vadd.f32 %v744, %v816
  %v818 = vpop.f32.mrf.mxu0
  %v819 = vadd.f32 %v746, %v818
  %820 = vmatprep.mubr.bf16.mxu0 0
  %821 = vmatmul.mubr.bf16.gmra.mxu0 %v206
  %v822 = vpop.f32.mrf.mxu0
  %v823 = vadd.f32 %v750, %v822
  %v824 = vpop.f32.mrf.mxu0
  %v825 = vadd.f32 %v752, %v824
  %v826 = vpop.f32.mrf.mxu0
  %v827 = vadd.f32 %v754, %v826
  %v828 = vpop.f32.mrf.mxu0
  %v829 = vadd.f32 %v756, %v828
  %830 = vmatprep.mubr.bf16.mxu0 0
  %831 = vmatmul.mubr.bf16.gmra.mxu0 %v209
  %v832 = vpop.f32.mrf.mxu0
  %v833 = vadd.f32 %v760, %v832
  %v834 = vpop.f32.mrf.mxu0
  %v835 = vadd.f32 %v762, %v834
  %v836 = vpop.f32.mrf.mxu0
  %v837 = vadd.f32 %v764, %v836
  %v838 = vpop.f32.mrf.mxu0
  %v839 = vadd.f32 %v766, %v838
  %840 = vmatprep.mubr.bf16.mxu0 0
  %841 = vmatmul.mubr.bf16.gmra.mxu0 %v212
  %v842 = vpop.f32.mrf.mxu0
  %v843 = vadd.f32 %v770, %v842
  %v844 = vpop.f32.mrf.mxu0
  %v845 = vadd.f32 %v772, %v844
  %v846 = vpop.f32.mrf.mxu0
  %v847 = vadd.f32 %v774, %v846
  %v848 = vpop.f32.mrf.mxu0
  %v849 = vadd.f32 %v776, %v848
  %850 = vdwg.mxu0
  %851 = vmatprep.subr.bf16.mxu0 %v544
  %852 = vmatpush1.bf16.msra.mxu0 %v543
  %853 = vmatprep.subr.bf16.mxu0 %v540
  %854 = vmatpush1.bf16.msra.mxu0 %v539
  %855 = vmatprep.subr.bf16.mxu0 %v536
  %856 = vmatpush1.bf16.msra.mxu0 %v535
  %857 = vmatprep.subr.bf16.mxu0 %v532
  %858 = vmatpush1.bf16.msra.mxu0 %v531
  %859 = vmatprep.subr.bf16.mxu0 %v528
  %860 = vmatpush1.bf16.msra.mxu0 %v527
  %861 = vmatprep.subr.bf16.mxu0 %v524
  %862 = vmatpush1.bf16.msra.mxu0 %v523
  %863 = vmatprep.subr.bf16.mxu0 %v520
  %864 = vmatpush1.bf16.msra.mxu0 %v519
  %865 = vmatprep.subr.bf16.mxu0 %v516
  %866 = vmatpush1.bf16.msra.mxu0 %v515
  %867 = vmatprep.subr.bf16.mxu0 %v576
  %868 = vmatpush2.bf16.msra.mxu0 %v575
  %869 = vmatprep.subr.bf16.mxu0 %v572
  %870 = vmatpush2.bf16.msra.mxu0 %v571
  %871 = vmatprep.subr.bf16.mxu0 %v568
  %872 = vmatpush2.bf16.msra.mxu0 %v567
  %873 = vmatprep.subr.bf16.mxu0 %v564
  %874 = vmatpush2.bf16.msra.mxu0 %v563
  %875 = vmatprep.subr.bf16.mxu0 %v560
  %876 = vmatpush2.bf16.msra.mxu0 %v559
  %877 = vmatprep.subr.bf16.mxu0 %v556
  %878 = vmatpush2.bf16.msra.mxu0 %v555
  %879 = vmatprep.subr.bf16.mxu0 %v552
  %880 = vmatpush2.bf16.msra.mxu0 %v551
  %881 = vmatprep.subr.bf16.mxu0 %v548
  %882 = vmatpush2.bf16.msra.mxu0 %v547
  %883 = vmatprep.mubr.bf16.mxu0 %v202
  %884 = vmatmul.mubr.bf16.gmra.mxu0 %v201
  %v885 = vpop.f32.mrf.mxu0
  %v886 = vadd.f32 %v152, %v885
  %v887 = vpop.f32.mrf.mxu0
  %v888 = vadd.f32 %v156, %v887
  %v889 = vpop.f32.mrf.mxu0
  %v890 = vadd.f32 %v152, %v889
  %v891 = vpop.f32.mrf.mxu0
  %v892 = vadd.f32 %v156, %v891
  %893 = vmatprep.mubr.bf16.mxu0 %v205
  %894 = vmatmul.mubr.bf16.gmra.mxu0 %v204
  %v895 = vpop.f32.mrf.mxu0
  %v896 = vadd.f32 %v152, %v895
  %v897 = vpop.f32.mrf.mxu0
  %v898 = vadd.f32 %v156, %v897
  %v899 = vpop.f32.mrf.mxu0
  %v900 = vadd.f32 %v152, %v899
  %v901 = vpop.f32.mrf.mxu0
  %v902 = vadd.f32 %v156, %v901
  %903 = vmatprep.mubr.bf16.mxu0 %v208
  %904 = vmatmul.mubr.bf16.gmra.mxu0 %v207
  %v905 = vpop.f32.mrf.mxu0
  %v906 = vadd.f32 %v152, %v905
  %v907 = vpop.f32.mrf.mxu0
  %v908 = vadd.f32 %v156, %v907
  %v909 = vpop.f32.mrf.mxu0
  %v910 = vadd.f32 %v152, %v909
  %v911 = vpop.f32.mrf.mxu0
  %v912 = vadd.f32 %v156, %v911
  %913 = vmatprep.mubr.bf16.mxu0 %v211
  %914 = vmatmul.mubr.bf16.gmra.mxu0 %v210
  %v915 = vpop.f32.mrf.mxu0
  %v916 = vadd.f32 %v152, %v915
  %v917 = vpop.f32.mrf.mxu0
  %v918 = vadd.f32 %v156, %v917
  %v919 = vpop.f32.mrf.mxu0
  %v920 = vadd.f32 %v152, %v919
  %v921 = vpop.f32.mrf.mxu0
  %v922 = vadd.f32 %v156, %v921
  %923 = vdwg.mxu0
  %924 = vmatprep.subr.bf16.mxu0 %v608
  %925 = vmatpush1.bf16.msra.mxu0 %v607
  %926 = vmatprep.subr.bf16.mxu0 %v604
  %927 = vmatpush1.bf16.msra.mxu0 %v603
  %928 = vmatprep.subr.bf16.mxu0 %v600
  %929 = vmatpush1.bf16.msra.mxu0 %v599
  %930 = vmatprep.subr.bf16.mxu0 %v596
  %931 = vmatpush1.bf16.msra.mxu0 %v595
  %932 = vmatprep.subr.bf16.mxu0 %v592
  %933 = vmatpush1.bf16.msra.mxu0 %v591
  %934 = vmatprep.subr.bf16.mxu0 %v588
  %935 = vmatpush1.bf16.msra.mxu0 %v587
  %936 = vmatprep.subr.bf16.mxu0 %v584
  %937 = vmatpush1.bf16.msra.mxu0 %v583
  %938 = vmatprep.subr.bf16.mxu0 %v580
  %939 = vmatpush1.bf16.msra.mxu0 %v579
  %940 = vmatprep.subr.bf16.mxu0 0
  %941 = vmatpush2.bf16.msra.mxu0 0
  %942 = vmatprep.subr.bf16.mxu0 0
  %943 = vmatpush2.bf16.msra.mxu0 0
  %944 = vmatprep.subr.bf16.mxu0 0
  %945 = vmatpush2.bf16.msra.mxu0 0
  %946 = vmatprep.subr.bf16.mxu0 0
  %947 = vmatpush2.bf16.msra.mxu0 0
  %948 = vmatprep.subr.bf16.mxu0 0
  %949 = vmatpush2.bf16.msra.mxu0 0
  %950 = vmatprep.subr.bf16.mxu0 0
  %951 = vmatpush2.bf16.msra.mxu0 0
  %952 = vmatprep.subr.bf16.mxu0 0
  %953 = vmatpush2.bf16.msra.mxu0 0
  %954 = vmatprep.subr.bf16.mxu0 0
  %955 = vmatpush2.bf16.msra.mxu0 0
  %956 = vmatprep.mubr.bf16.mxu0 0
  %957 = vmatmul.mubr.bf16.gmra.mxu0 %v203
  %v958 = vpop.f32.mrf.mxu0
  %v959 = vadd.f32 %v886, %v958
  %v960 = vpop.f32.mrf.mxu0
  %v961 = vadd.f32 %v888, %v960
  %v962 = vpop.f32.mrf.mxu0
  %v963 = vadd.f32 %v890, %v962
  %v964 = vpop.f32.mrf.mxu0
  %v965 = vadd.f32 %v892, %v964
  %966 = vmatprep.mubr.bf16.mxu0 0
  %967 = vmatmul.mubr.bf16.gmra.mxu0 %v206
  %v968 = vpop.f32.mrf.mxu0
  %v969 = vadd.f32 %v896, %v968
  %v970 = vpop.f32.mrf.mxu0
  %v971 = vadd.f32 %v898, %v970
  %v972 = vpop.f32.mrf.mxu0
  %v973 = vadd.f32 %v900, %v972
  %v974 = vpop.f32.mrf.mxu0
  %v975 = vadd.f32 %v902, %v974
  %976 = vmatprep.mubr.bf16.mxu0 0
  %977 = vmatmul.mubr.bf16.gmra.mxu0 %v209
  %v978 = vpop.f32.mrf.mxu0
  %v979 = vadd.f32 %v906, %v978
  %v980 = vpop.f32.mrf.mxu0
  %v981 = vadd.f32 %v908, %v980
  %v982 = vpop.f32.mrf.mxu0
  %v983 = vadd.f32 %v910, %v982
  %v984 = vpop.f32.mrf.mxu0
  %v985 = vadd.f32 %v912, %v984
  %986 = vmatprep.mubr.bf16.mxu0 0
  %987 = vmatmul.mubr.bf16.gmra.mxu0 %v212
  %v988 = vpop.f32.mrf.mxu0
  %v989 = vadd.f32 %v916, %v988
  %v990 = vpop.f32.mrf.mxu0
  %v991 = vadd.f32 %v918, %v990
  %v992 = vpop.f32.mrf.mxu0
  %v993 = vadd.f32 %v920, %v992
  %v994 = vpop.f32.mrf.mxu0
  %v995 = vadd.f32 %v922, %v994
  %996 = vdwg.mxu0
  %v997 = vmax.f32 %v813, 0.0
  %v998 = vmax.f32 %v815, 0.0
  %v999 = vmax.f32 %v959, 0.0
  %v1000 = vmax.f32 %v961, 0.0
  %v1001 = vmax.f32 %v817, 0.0
  %v1002 = vmax.f32 %v819, 0.0
  %v1003 = vmax.f32 %v963, 0.0
  %v1004 = vmax.f32 %v965, 0.0
  %v1005 = vmax.f32 %v823, 0.0
  %v1006 = vmax.f32 %v825, 0.0
  %v1007 = vmax.f32 %v969, 0.0
  %v1008 = vmax.f32 %v971, 0.0
  %v1009 = vmax.f32 %v827, 0.0
  %v1010 = vmax.f32 %v829, 0.0
  %v1011 = vmax.f32 %v973, 0.0
  %v1012 = vmax.f32 %v975, 0.0
  %v1013 = vmax.f32 %v833, 0.0
  %v1014 = vmax.f32 %v835, 0.0
  %v1015 = vmax.f32 %v979, 0.0
  %v1016 = vmax.f32 %v981, 0.0
  %v1017 = vmax.f32 %v837, 0.0
  %v1018 = vmax.f32 %v839, 0.0
  %v1019 = vmax.f32 %v983, 0.0
  %v1020 = vmax.f32 %v985, 0.0
  %v1021 = vmax.f32 %v843, 0.0
  %v1022 = vmax.f32 %v845, 0.0
  %v1023 = vmax.f32 %v989, 0.0
  %v1024 = vmax.f32 %v991, 0.0
  %v1025 = vmax.f32 %v847, 0.0
  %v1026 = vmax.f32 %v849, 0.0
  %v1027 = vmax.f32 %v993, 0.0
  %v1028 = vmax.f32 %v995, 0.0
  %v1029 = vpack.c.bf16 %v1001, %v997
  %v1030 = vpack.c.bf16 %v1002, %v998
  %v1031 = vpack.c.bf16 %v1003, %v999
  %v1032 = vpack.c.bf16 %v1004, %v1000
  %v1033 = vpack.c.bf16 %v1009, %v1005
  %v1034 = vpack.c.bf16 %v1010, %v1006
  %v1035 = vpack.c.bf16 %v1011, %v1007
  %v1036 = vpack.c.bf16 %v1012, %v1008
  %v1037 = vpack.c.bf16 %v1017, %v1013
  %v1038 = vpack.c.bf16 %v1018, %v1014
  %v1039 = vpack.c.bf16 %v1019, %v1015
  %v1040 = vpack.c.bf16 %v1020, %v1016
  %v1041 = vpack.c.bf16 %v1025, %v1021
  %v1042 = vpack.c.bf16 %v1026, %v1022
  %v1043 = vpack.c.bf16 %v1027, %v1023
  %v1044 = vpack.c.bf16 %v1028, %v1024
  %v1045 = vld [vmem:[%s3] sm:$0xff]
  %v1046 = vld [vmem:[%s3 + $0x8] sm:$0xff]
  %v1047 = vld [vmem:[%s3 + $0x10] sm:$0xff]
  %v1048 = vld [vmem:[%s3 + $0x18] sm:$0xff]
  %v1049 = vld [vmem:[%s3 + $0x20] sm:$0xff]
  %v1050 = vld [vmem:[%s3 + $0x28] sm:$0xff]
  %v1051 = vld [vmem:[%s3 + $0x30] sm:$0xff]
  %v1052 = vld [vmem:[%s3 + $0x38] sm:$0xff]
  %v1053 = vld [vmem:[%s3 + $0x40] sm:$0xff]
  %v1054 = vld [vmem:[%s3 + $0x48] sm:$0xff]
  %v1055 = vld [vmem:[%s3 + $0x50] sm:$0xff]
  %v1056 = vld [vmem:[%s3 + $0x58] sm:$0xff]
  %v1057 = vld [vmem:[%s3 + $0x60] sm:$0xff]
  %v1058 = vld [vmem:[%s3 + $0x68] sm:$0xff]
  %v1059 = vld [vmem:[%s3 + $0x70] sm:$0xff]
  %v1060 = vld [vmem:[%s3 + $0x78] sm:$0xff]
  %v1061 = vld [vmem:[%s3 + $0x80] sm:$0xff]
  %v1062 = vld [vmem:[%s3 + $0x88] sm:$0xff]
  %v1063 = vld [vmem:[%s3 + $0x90] sm:$0xff]
  %v1064 = vld [vmem:[%s3 + $0x98] sm:$0xff]
  %v1065 = vld [vmem:[%s3 + $0xa0] sm:$0xff]
  %v1066 = vld [vmem:[%s3 + $0xa8] sm:$0xff]
  %v1067 = vld [vmem:[%s3 + $0xb0] sm:$0xff]
  %v1068 = vld [vmem:[%s3 + $0xb8] sm:$0xff]
  %v1069 = vld [vmem:[%s3 + $0xc0] sm:$0xff]
  %v1070 = vld [vmem:[%s3 + $0xc8] sm:$0xff]
  %v1071 = vld [vmem:[%s3 + $0xd0] sm:$0xff]
  %v1072 = vld [vmem:[%s3 + $0xd8] sm:$0xff]
  %v1073 = vld [vmem:[%s3 + $0xe0] sm:$0xff]
  %v1074 = vld [vmem:[%s3 + $0xe8] sm:$0xff]
  %v1075 = vld [vmem:[%s3 + $0xf0] sm:$0xff]
  %v1076 = vld [vmem:[%s3 + $0xf8] sm:$0xff]
  %v1077 = vld [vmem:[%s3 + $0x100] sm:$0xff]
  %v1078 = vld [vmem:[%s3 + $0x108] sm:$0xff]
  %v1079 = vld [vmem:[%s3 + $0x110] sm:$0xff]
  %v1080 = vld [vmem:[%s3 + $0x118] sm:$0xff]
  %v1081 = vld [vmem:[%s3 + $0x120] sm:$0xff]
  %v1082 = vld [vmem:[%s3 + $0x128] sm:$0xff]
  %v1083 = vld [vmem:[%s3 + $0x130] sm:$0xff]
  %v1084 = vld [vmem:[%s3 + $0x138] sm:$0xff]
  %v1085 = vld [vmem:[%s3 + $0x140] sm:$0xff]
  %v1086 = vld [vmem:[%s3 + $0x148] sm:$0xff]
  %v1087 = vld [vmem:[%s3 + $0x150] sm:$0xff]
  %v1088 = vld [vmem:[%s3 + $0x158] sm:$0xff]
  %v1089 = vld [vmem:[%s3 + $0x160] sm:$0xff]
  %v1090 = vld [vmem:[%s3 + $0x168] sm:$0xff]
  %v1091 = vld [vmem:[%s3 + $0x170] sm:$0xff]
  %v1092 = vld [vmem:[%s3 + $0x178] sm:$0xff]
  %v1093 = vld [vmem:[%s3 + $0x180] sm:$0xff]
  %v1094 = vld [vmem:[%s3 + $0x188] sm:$0xff]
  %v1095 = vld [vmem:[%s3 + $0x190] sm:$0xff]
  %v1096 = vld [vmem:[%s3 + $0x198] sm:$0xff]
  %v1097 = vld [vmem:[%s3 + $0x1a0] sm:$0xff]
  %v1098 = vld [vmem:[%s3 + $0x1a8] sm:$0xff]
  %v1099 = vld [vmem:[%s3 + $0x1b0] sm:$0xff]
  %v1100 = vld [vmem:[%s3 + $0x1b8] sm:$0xff]
  %v1101 = vld [vmem:[%s3 + $0x1c0] sm:$0xff]
  %v1102 = vld [vmem:[%s3 + $0x1c8] sm:$0xff]
  %v1103 = vld [vmem:[%s3 + $0x1d0] sm:$0xff]
  %v1104 = vld [vmem:[%s3 + $0x1d8] sm:$0xff]
  %v1105 = vld [vmem:[%s3 + $0x1e0] sm:$0xff]
  %v1106 = vld [vmem:[%s3 + $0x1e8] sm:$0xff]
  %v1107 = vld [vmem:[%s3 + $0x1f0] sm:$0xff]
  %v1108 = vld [vmem:[%s3 + $0x1f8] sm:$0xff]
  %v1109 = vld [vmem:[%s3 + $0x200] sm:$0xff]
  %v1110 = vld [vmem:[%s3 + $0x208] sm:$0xff]
  %v1111 = vld [vmem:[%s3 + $0x210] sm:$0xff]
  %v1112 = vld [vmem:[%s3 + $0x218] sm:$0xff]
  %v1113 = vld [vmem:[%s3 + $0x220] sm:$0xff]
  %v1114 = vld [vmem:[%s3 + $0x228] sm:$0xff]
  %v1115 = vld [vmem:[%s3 + $0x230] sm:$0xff]
  %v1116 = vld [vmem:[%s3 + $0x238] sm:$0xff]
  %v1117 = vld [vmem:[%s3 + $0x240] sm:$0xff]
  %v1118 = vld [vmem:[%s3 + $0x248] sm:$0xff]
  %v1119 = vld [vmem:[%s3 + $0x250] sm:$0xff]
  %v1120 = vld [vmem:[%s3 + $0x258] sm:$0xff]
  %v1121 = vld [vmem:[%s3 + $0x260] sm:$0xff]
  %v1122 = vld [vmem:[%s3 + $0x268] sm:$0xff]
  %v1123 = vld [vmem:[%s3 + $0x270] sm:$0xff]
  %v1124 = vld [vmem:[%s3 + $0x278] sm:$0xff]
  %v1125 = vld [vmem:[%s3 + $0x280] sm:$0xff]
  %v1126 = vld [vmem:[%s3 + $0x288] sm:$0xff]
  %v1127 = vld [vmem:[%s3 + $0x290] sm:$0xff]
  %v1128 = vld [vmem:[%s3 + $0x298] sm:$0xff]
  %v1129 = vld [vmem:[%s3 + $0x2a0] sm:$0xff]
  %v1130 = vld [vmem:[%s3 + $0x2a8] sm:$0xff]
  %v1131 = vld [vmem:[%s3 + $0x2b0] sm:$0xff]
  %v1132 = vld [vmem:[%s3 + $0x2b8] sm:$0xff]
  %v1133 = vld [vmem:[%s3 + $0x2c0] sm:$0xff]
  %v1134 = vld [vmem:[%s3 + $0x2c8] sm:$0xff]
  %v1135 = vld [vmem:[%s3 + $0x2d0] sm:$0xff]
  %v1136 = vld [vmem:[%s3 + $0x2d8] sm:$0xff]
  %v1137 = vld [vmem:[%s3 + $0x2e0] sm:$0xff]
  %v1138 = vld [vmem:[%s3 + $0x2e8] sm:$0xff]
  %v1139 = vld [vmem:[%s3 + $0x2f0] sm:$0xff]
  %v1140 = vld [vmem:[%s3 + $0x2f8] sm:$0xff]
  %v1141 = vld [vmem:[%s3 + $0x300] sm:$0xff]
  %v1142 = vld [vmem:[%s3 + $0x308] sm:$0xff]
  %v1143 = vld [vmem:[%s3 + $0x310] sm:$0xff]
  %v1144 = vld [vmem:[%s3 + $0x318] sm:$0xff]
  %v1145 = vld [vmem:[%s3 + $0x320] sm:$0xff]
  %v1146 = vld [vmem:[%s3 + $0x328] sm:$0xff]
  %v1147 = vld [vmem:[%s3 + $0x330] sm:$0xff]
  %v1148 = vld [vmem:[%s3 + $0x338] sm:$0xff]
  %v1149 = vld [vmem:[%s3 + $0x340] sm:$0xff]
  %v1150 = vld [vmem:[%s3 + $0x348] sm:$0xff]
  %v1151 = vld [vmem:[%s3 + $0x350] sm:$0xff]
  %v1152 = vld [vmem:[%s3 + $0x358] sm:$0xff]
  %v1153 = vld [vmem:[%s3 + $0x360] sm:$0xff]
  %v1154 = vld [vmem:[%s3 + $0x368] sm:$0xff]
  %v1155 = vld [vmem:[%s3 + $0x370] sm:$0xff]
  %v1156 = vld [vmem:[%s3 + $0x378] sm:$0xff]
  %v1157 = vld [vmem:[%s3 + $0x380] sm:$0xff]
  %v1158 = vld [vmem:[%s3 + $0x388] sm:$0xff]
  %v1159 = vld [vmem:[%s3 + $0x390] sm:$0xff]
  %v1160 = vld [vmem:[%s3 + $0x398] sm:$0xff]
  %v1161 = vld [vmem:[%s3 + $0x3a0] sm:$0xff]
  %v1162 = vld [vmem:[%s3 + $0x3a8] sm:$0xff]
  %v1163 = vld [vmem:[%s3 + $0x3b0] sm:$0xff]
  %v1164 = vld [vmem:[%s3 + $0x3b8] sm:$0xff]
  %v1165 = vld [vmem:[%s3 + $0x3c0] sm:$0xff]
  %v1166 = vld [vmem:[%s3 + $0x3c8] sm:$0xff]
  %v1167 = vld [vmem:[%s3 + $0x3d0] sm:$0xff]
  %v1168 = vld [vmem:[%s3 + $0x3d8] sm:$0xff]
  %v1169 = vld [vmem:[%s3 + $0x3e0] sm:$0xff]
  %v1170 = vld [vmem:[%s3 + $0x3e8] sm:$0xff]
  %v1171 = vld [vmem:[%s3 + $0x3f0] sm:$0xff]
  %v1172 = vld [vmem:[%s3 + $0x3f8] sm:$0xff]
  %v1173 = vld [vmem:[%s4] sm:$0xf]
  %v1175 = vlaneseq
  %v1176 = vshrl.u32 %v1175, 7
  %v1177 = vsub.s32 0, %v1176
  %v1178 = vrot.slane %v1173, %v1177
  %v1179 = vlaneseq
  %v1180 = vshrl.u32 %v1179, 7
  %v1181 = vsub.s32 1, %v1180
  %v1182 = vrot.slane %v1173, %v1181
  %v1183 = vlaneseq
  %v1184 = vshrl.u32 %v1183, 7
  %v1185 = vsub.s32 2, %v1184
  %v1186 = vrot.slane %v1173, %v1185
  %v1187 = vlaneseq
  %v1188 = vshrl.u32 %v1187, 7
  %v1189 = vsub.s32 3, %v1188
  %v1190 = vrot.slane %v1173, %v1189
  %v1323 = vunpack.c.l.b16 %v1045
  %v1324 = vunpack.c.h.b16 %v1045
  %v1325 = vunpack.c.l.b16 %v1046
  %v1326 = vunpack.c.h.b16 %v1046
  %v1327 = vunpack.c.l.b16 %v1047
  %v1328 = vunpack.c.h.b16 %v1047
  %v1329 = vunpack.c.l.b16 %v1048
  %v1330 = vunpack.c.h.b16 %v1048
  %v1331 = vunpack.c.l.b16 %v1049
  %v1332 = vunpack.c.h.b16 %v1049
  %v1333 = vunpack.c.l.b16 %v1050
  %v1334 = vunpack.c.h.b16 %v1050
  %v1335 = vunpack.c.l.b16 %v1051
  %v1336 = vunpack.c.h.b16 %v1051
  %v1337 = vunpack.c.l.b16 %v1052
  %v1338 = vunpack.c.h.b16 %v1052
  %v1339 = vunpack.c.l.b16 %v1053
  %v1340 = vunpack.c.h.b16 %v1053
  %v1341 = vunpack.c.l.b16 %v1054
  %v1342 = vunpack.c.h.b16 %v1054
  %v1343 = vunpack.c.l.b16 %v1055
  %v1344 = vunpack.c.h.b16 %v1055
  %v1345 = vunpack.c.l.b16 %v1056
  %v1346 = vunpack.c.h.b16 %v1056
  %v1347 = vunpack.c.l.b16 %v1057
  %v1348 = vunpack.c.h.b16 %v1057
  %v1349 = vunpack.c.l.b16 %v1058
  %v1350 = vunpack.c.h.b16 %v1058
  %v1351 = vunpack.c.l.b16 %v1059
  %v1352 = vunpack.c.h.b16 %v1059
  %v1353 = vunpack.c.l.b16 %v1060
  %v1354 = vunpack.c.h.b16 %v1060
  %v1355 = vunpack.c.l.b16 %v1061
  %v1356 = vunpack.c.h.b16 %v1061
  %v1357 = vunpack.c.l.b16 %v1062
  %v1358 = vunpack.c.h.b16 %v1062
  %v1359 = vunpack.c.l.b16 %v1063
  %v1360 = vunpack.c.h.b16 %v1063
  %v1361 = vunpack.c.l.b16 %v1064
  %v1362 = vunpack.c.h.b16 %v1064
  %v1363 = vunpack.c.l.b16 %v1065
  %v1364 = vunpack.c.h.b16 %v1065
  %v1365 = vunpack.c.l.b16 %v1066
  %v1366 = vunpack.c.h.b16 %v1066
  %v1367 = vunpack.c.l.b16 %v1067
  %v1368 = vunpack.c.h.b16 %v1067
  %v1369 = vunpack.c.l.b16 %v1068
  %v1370 = vunpack.c.h.b16 %v1068
  %v1371 = vunpack.c.l.b16 %v1069
  %v1372 = vunpack.c.h.b16 %v1069
  %v1373 = vunpack.c.l.b16 %v1070
  %v1374 = vunpack.c.h.b16 %v1070
  %v1375 = vunpack.c.l.b16 %v1071
  %v1376 = vunpack.c.h.b16 %v1071
  %v1377 = vunpack.c.l.b16 %v1072
  %v1378 = vunpack.c.h.b16 %v1072
  %v1379 = vunpack.c.l.b16 %v1073
  %v1380 = vunpack.c.h.b16 %v1073
  %v1381 = vunpack.c.l.b16 %v1074
  %v1382 = vunpack.c.h.b16 %v1074
  %v1383 = vunpack.c.l.b16 %v1075
  %v1384 = vunpack.c.h.b16 %v1075
  %v1385 = vunpack.c.l.b16 %v1076
  %v1386 = vunpack.c.h.b16 %v1076
  %v1387 = vunpack.c.l.b16 %v1077
  %v1388 = vunpack.c.h.b16 %v1077
  %v1389 = vunpack.c.l.b16 %v1078
  %v1390 = vunpack.c.h.b16 %v1078
  %v1391 = vunpack.c.l.b16 %v1079
  %v1392 = vunpack.c.h.b16 %v1079
  %v1393 = vunpack.c.l.b16 %v1080
  %v1394 = vunpack.c.h.b16 %v1080
  %v1395 = vunpack.c.l.b16 %v1081
  %v1396 = vunpack.c.h.b16 %v1081
  %v1397 = vunpack.c.l.b16 %v1082
  %v1398 = vunpack.c.h.b16 %v1082
  %v1399 = vunpack.c.l.b16 %v1083
  %v1400 = vunpack.c.h.b16 %v1083
  %v1401 = vunpack.c.l.b16 %v1084
  %v1402 = vunpack.c.h.b16 %v1084
  %v1403 = vunpack.c.l.b16 %v1085
  %v1404 = vunpack.c.h.b16 %v1085
  %v1405 = vunpack.c.l.b16 %v1086
  %v1406 = vunpack.c.h.b16 %v1086
  %v1407 = vunpack.c.l.b16 %v1087
  %v1408 = vunpack.c.h.b16 %v1087
  %v1409 = vunpack.c.l.b16 %v1088
  %v1410 = vunpack.c.h.b16 %v1088
  %v1411 = vunpack.c.l.b16 %v1089
  %v1412 = vunpack.c.h.b16 %v1089
  %v1413 = vunpack.c.l.b16 %v1090
  %v1414 = vunpack.c.h.b16 %v1090
  %v1415 = vunpack.c.l.b16 %v1091
  %v1416 = vunpack.c.h.b16 %v1091
  %v1417 = vunpack.c.l.b16 %v1092
  %v1418 = vunpack.c.h.b16 %v1092
  %v1419 = vunpack.c.l.b16 %v1093
  %v1420 = vunpack.c.h.b16 %v1093
  %v1421 = vunpack.c.l.b16 %v1094
  %v1422 = vunpack.c.h.b16 %v1094
  %v1423 = vunpack.c.l.b16 %v1095
  %v1424 = vunpack.c.h.b16 %v1095
  %v1425 = vunpack.c.l.b16 %v1096
  %v1426 = vunpack.c.h.b16 %v1096
  %v1427 = vunpack.c.l.b16 %v1097
  %v1428 = vunpack.c.h.b16 %v1097
  %v1429 = vunpack.c.l.b16 %v1098
  %v1430 = vunpack.c.h.b16 %v1098
  %v1431 = vunpack.c.l.b16 %v1099
  %v1432 = vunpack.c.h.b16 %v1099
  %v1433 = vunpack.c.l.b16 %v1100
  %v1434 = vunpack.c.h.b16 %v1100
  %v1435 = vunpack.c.l.b16 %v1101
  %v1436 = vunpack.c.h.b16 %v1101
  %v1437 = vunpack.c.l.b16 %v1102
  %v1438 = vunpack.c.h.b16 %v1102
  %v1439 = vunpack.c.l.b16 %v1103
  %v1440 = vunpack.c.h.b16 %v1103
  %v1441 = vunpack.c.l.b16 %v1104
  %v1442 = vunpack.c.h.b16 %v1104
  %v1443 = vunpack.c.l.b16 %v1105
  %v1444 = vunpack.c.h.b16 %v1105
  %v1445 = vunpack.c.l.b16 %v1106
  %v1446 = vunpack.c.h.b16 %v1106
  %v1447 = vunpack.c.l.b16 %v1107
  %v1448 = vunpack.c.h.b16 %v1107
  %v1449 = vunpack.c.l.b16 %v1108
  %v1450 = vunpack.c.h.b16 %v1108
  %v1451 = vunpack.c.l.b16 %v1109
  %v1452 = vunpack.c.h.b16 %v1109
  %v1453 = vunpack.c.l.b16 %v1110
  %v1454 = vunpack.c.h.b16 %v1110
  %v1455 = vunpack.c.l.b16 %v1111
  %v1456 = vunpack.c.h.b16 %v1111
  %v1457 = vunpack.c.l.b16 %v1112
  %v1458 = vunpack.c.h.b16 %v1112
  %v1459 = vunpack.c.l.b16 %v1113
  %v1460 = vunpack.c.h.b16 %v1113
  %v1461 = vunpack.c.l.b16 %v1114
  %v1462 = vunpack.c.h.b16 %v1114
  %v1463 = vunpack.c.l.b16 %v1115
  %v1464 = vunpack.c.h.b16 %v1115
  %v1465 = vunpack.c.l.b16 %v1116
  %v1466 = vunpack.c.h.b16 %v1116
  %v1467 = vunpack.c.l.b16 %v1117
  %v1468 = vunpack.c.h.b16 %v1117
  %v1469 = vunpack.c.l.b16 %v1118
  %v1470 = vunpack.c.h.b16 %v1118
  %v1471 = vunpack.c.l.b16 %v1119
  %v1472 = vunpack.c.h.b16 %v1119
  %v1473 = vunpack.c.l.b16 %v1120
  %v1474 = vunpack.c.h.b16 %v1120
  %v1475 = vunpack.c.l.b16 %v1121
  %v1476 = vunpack.c.h.b16 %v1121
  %v1477 = vunpack.c.l.b16 %v1122
  %v1478 = vunpack.c.h.b16 %v1122
  %v1479 = vunpack.c.l.b16 %v1123
  %v1480 = vunpack.c.h.b16 %v1123
  %v1481 = vunpack.c.l.b16 %v1124
  %v1482 = vunpack.c.h.b16 %v1124
  %v1483 = vunpack.c.l.b16 %v1125
  %v1484 = vunpack.c.h.b16 %v1125
  %v1485 = vunpack.c.l.b16 %v1126
  %v1486 = vunpack.c.h.b16 %v1126
  %v1487 = vunpack.c.l.b16 %v1127
  %v1488 = vunpack.c.h.b16 %v1127
  %v1489 = vunpack.c.l.b16 %v1128
  %v1490 = vunpack.c.h.b16 %v1128
  %v1491 = vunpack.c.l.b16 %v1129
  %v1492 = vunpack.c.h.b16 %v1129
  %v1493 = vunpack.c.l.b16 %v1130
  %v1494 = vunpack.c.h.b16 %v1130
  %v1495 = vunpack.c.l.b16 %v1131
  %v1496 = vunpack.c.h.b16 %v1131
  %v1497 = vunpack.c.l.b16 %v1132
  %v1498 = vunpack.c.h.b16 %v1132
  %v1499 = vunpack.c.l.b16 %v1133
  %v1500 = vunpack.c.h.b16 %v1133
  %v1501 = vunpack.c.l.b16 %v1134
  %v1502 = vunpack.c.h.b16 %v1134
  %v1503 = vunpack.c.l.b16 %v1135
  %v1504 = vunpack.c.h.b16 %v1135
  %v1505 = vunpack.c.l.b16 %v1136
  %v1506 = vunpack.c.h.b16 %v1136
  %v1507 = vunpack.c.l.b16 %v1137
  %v1508 = vunpack.c.h.b16 %v1137
  %v1509 = vunpack.c.l.b16 %v1138
  %v1510 = vunpack.c.h.b16 %v1138
  %v1511 = vunpack.c.l.b16 %v1139
  %v1512 = vunpack.c.h.b16 %v1139
  %v1513 = vunpack.c.l.b16 %v1140
  %v1514 = vunpack.c.h.b16 %v1140
  %v1515 = vunpack.c.l.b16 %v1141
  %v1516 = vunpack.c.h.b16 %v1141
  %v1517 = vunpack.c.l.b16 %v1142
  %v1518 = vunpack.c.h.b16 %v1142
  %v1519 = vunpack.c.l.b16 %v1143
  %v1520 = vunpack.c.h.b16 %v1143
  %v1521 = vunpack.c.l.b16 %v1144
  %v1522 = vunpack.c.h.b16 %v1144
  %v1523 = vunpack.c.l.b16 %v1145
  %v1524 = vunpack.c.h.b16 %v1145
  %v1525 = vunpack.c.l.b16 %v1146
  %v1526 = vunpack.c.h.b16 %v1146
  %v1527 = vunpack.c.l.b16 %v1147
  %v1528 = vunpack.c.h.b16 %v1147
  %v1529 = vunpack.c.l.b16 %v1148
  %v1530 = vunpack.c.h.b16 %v1148
  %v1531 = vunpack.c.l.b16 %v1149
  %v1532 = vunpack.c.h.b16 %v1149
  %v1533 = vunpack.c.l.b16 %v1150
  %v1534 = vunpack.c.h.b16 %v1150
  %v1535 = vunpack.c.l.b16 %v1151
  %v1536 = vunpack.c.h.b16 %v1151
  %v1537 = vunpack.c.l.b16 %v1152
  %v1538 = vunpack.c.h.b16 %v1152
  %v1539 = vunpack.c.l.b16 %v1153
  %v1540 = vunpack.c.h.b16 %v1153
  %v1541 = vunpack.c.l.b16 %v1154
  %v1542 = vunpack.c.h.b16 %v1154
  %v1543 = vunpack.c.l.b16 %v1155
  %v1544 = vunpack.c.h.b16 %v1155
  %v1545 = vunpack.c.l.b16 %v1156
  %v1546 = vunpack.c.h.b16 %v1156
  %v1547 = vunpack.c.l.b16 %v1157
  %v1548 = vunpack.c.h.b16 %v1157
  %v1549 = vunpack.c.l.b16 %v1158
  %v1550 = vunpack.c.h.b16 %v1158
  %v1551 = vunpack.c.l.b16 %v1159
  %v1552 = vunpack.c.h.b16 %v1159
  %v1553 = vunpack.c.l.b16 %v1160
  %v1554 = vunpack.c.h.b16 %v1160
  %v1555 = vunpack.c.l.b16 %v1161
  %v1556 = vunpack.c.h.b16 %v1161
  %v1557 = vunpack.c.l.b16 %v1162
  %v1558 = vunpack.c.h.b16 %v1162
  %v1559 = vunpack.c.l.b16 %v1163
  %v1560 = vunpack.c.h.b16 %v1163
  %v1561 = vunpack.c.l.b16 %v1164
  %v1562 = vunpack.c.h.b16 %v1164
  %v1563 = vunpack.c.l.b16 %v1165
  %v1564 = vunpack.c.h.b16 %v1165
  %v1565 = vunpack.c.l.b16 %v1166
  %v1566 = vunpack.c.h.b16 %v1166
  %v1567 = vunpack.c.l.b16 %v1167
  %v1568 = vunpack.c.h.b16 %v1167
  %v1569 = vunpack.c.l.b16 %v1168
  %v1570 = vunpack.c.h.b16 %v1168
  %v1571 = vunpack.c.l.b16 %v1169
  %v1572 = vunpack.c.h.b16 %v1169
  %v1573 = vunpack.c.l.b16 %v1170
  %v1574 = vunpack.c.h.b16 %v1170
  %v1575 = vunpack.c.l.b16 %v1171
  %v1576 = vunpack.c.h.b16 %v1171
  %v1577 = vunpack.c.l.b16 %v1172
  %v1578 = vunpack.c.h.b16 %v1172
  %v1579 = vpack.c.b16 %v1327, %v1323
  %v1580 = vpack.c.b16 %v1328, %v1324
  %v1581 = vpack.c.b16 %v1329, %v1325
  %v1582 = vpack.c.b16 %v1330, %v1326
  %v1583 = vpack.c.b16 %v1335, %v1331
  %v1584 = vpack.c.b16 %v1336, %v1332
  %v1585 = vpack.c.b16 %v1337, %v1333
  %v1586 = vpack.c.b16 %v1338, %v1334
  %v1587 = vpack.c.b16 %v1343, %v1339
  %v1588 = vpack.c.b16 %v1344, %v1340
  %v1589 = vpack.c.b16 %v1345, %v1341
  %v1590 = vpack.c.b16 %v1346, %v1342
  %v1591 = vpack.c.b16 %v1351, %v1347
  %v1592 = vpack.c.b16 %v1352, %v1348
  %v1593 = vpack.c.b16 %v1353, %v1349
  %v1594 = vpack.c.b16 %v1354, %v1350
  %v1595 = vpack.c.b16 %v1359, %v1355
  %v1596 = vpack.c.b16 %v1360, %v1356
  %v1597 = vpack.c.b16 %v1361, %v1357
  %v1598 = vpack.c.b16 %v1362, %v1358
  %v1599 = vpack.c.b16 %v1367, %v1363
  %v1600 = vpack.c.b16 %v1368, %v1364
  %v1601 = vpack.c.b16 %v1369, %v1365
  %v1602 = vpack.c.b16 %v1370, %v1366
  %v1603 = vpack.c.b16 %v1375, %v1371
  %v1604 = vpack.c.b16 %v1376, %v1372
  %v1605 = vpack.c.b16 %v1377, %v1373
  %v1606 = vpack.c.b16 %v1378, %v1374
  %v1607 = vpack.c.b16 %v1383, %v1379
  %v1608 = vpack.c.b16 %v1384, %v1380
  %v1609 = vpack.c.b16 %v1385, %v1381
  %v1610 = vpack.c.b16 %v1386, %v1382
  %v1611 = vpack.c.b16 %v1391, %v1387
  %v1612 = vpack.c.b16 %v1392, %v1388
  %v1613 = vpack.c.b16 %v1393, %v1389
  %v1614 = vpack.c.b16 %v1394, %v1390
  %v1615 = vpack.c.b16 %v1399, %v1395
  %v1616 = vpack.c.b16 %v1400, %v1396
  %v1617 = vpack.c.b16 %v1401, %v1397
  %v1618 = vpack.c.b16 %v1402, %v1398
  %v1619 = vpack.c.b16 %v1407, %v1403
  %v1620 = vpack.c.b16 %v1408, %v1404
  %v1621 = vpack.c.b16 %v1409, %v1405
  %v1622 = vpack.c.b16 %v1410, %v1406
  %v1623 = vpack.c.b16 %v1415, %v1411
  %v1624 = vpack.c.b16 %v1416, %v1412
  %v1625 = vpack.c.b16 %v1417, %v1413
  %v1626 = vpack.c.b16 %v1418, %v1414
  %v1627 = vpack.c.b16 %v1423, %v1419
  %v1628 = vpack.c.b16 %v1424, %v1420
  %v1629 = vpack.c.b16 %v1425, %v1421
  %v1630 = vpack.c.b16 %v1426, %v1422
  %v1631 = vpack.c.b16 %v1431, %v1427
  %v1632 = vpack.c.b16 %v1432, %v1428
  %v1633 = vpack.c.b16 %v1433, %v1429
  %v1634 = vpack.c.b16 %v1434, %v1430
  %v1635 = vpack.c.b16 %v1439, %v1435
  %v1636 = vpack.c.b16 %v1440, %v1436
  %v1637 = vpack.c.b16 %v1441, %v1437
  %v1638 = vpack.c.b16 %v1442, %v1438
  %v1639 = vpack.c.b16 %v1447, %v1443
  %v1640 = vpack.c.b16 %v1448, %v1444
  %v1641 = vpack.c.b16 %v1449, %v1445
  %v1642 = vpack.c.b16 %v1450, %v1446
  %v1643 = vpack.c.b16 %v1455, %v1451
  %v1644 = vpack.c.b16 %v1456, %v1452
  %v1645 = vpack.c.b16 %v1457, %v1453
  %v1646 = vpack.c.b16 %v1458, %v1454
  %v1647 = vpack.c.b16 %v1463, %v1459
  %v1648 = vpack.c.b16 %v1464, %v1460
  %v1649 = vpack.c.b16 %v1465, %v1461
  %v1650 = vpack.c.b16 %v1466, %v1462
  %v1651 = vpack.c.b16 %v1471, %v1467
  %v1652 = vpack.c.b16 %v1472, %v1468
  %v1653 = vpack.c.b16 %v1473, %v1469
  %v1654 = vpack.c.b16 %v1474, %v1470
  %v1655 = vpack.c.b16 %v1479, %v1475
  %v1656 = vpack.c.b16 %v1480, %v1476
  %v1657 = vpack.c.b16 %v1481, %v1477
  %v1658 = vpack.c.b16 %v1482, %v1478
  %v1659 = vpack.c.b16 %v1487, %v1483
  %v1660 = vpack.c.b16 %v1488, %v1484
  %v1661 = vpack.c.b16 %v1489, %v1485
  %v1662 = vpack.c.b16 %v1490, %v1486
  %v1663 = vpack.c.b16 %v1495, %v1491
  %v1664 = vpack.c.b16 %v1496, %v1492
  %v1665 = vpack.c.b16 %v1497, %v1493
  %v1666 = vpack.c.b16 %v1498, %v1494
  %v1667 = vpack.c.b16 %v1503, %v1499
  %v1668 = vpack.c.b16 %v1504, %v1500
  %v1669 = vpack.c.b16 %v1505, %v1501
  %v1670 = vpack.c.b16 %v1506, %v1502
  %v1671 = vpack.c.b16 %v1511, %v1507
  %v1672 = vpack.c.b16 %v1512, %v1508
  %v1673 = vpack.c.b16 %v1513, %v1509
  %v1674 = vpack.c.b16 %v1514, %v1510
  %v1675 = vpack.c.b16 %v1519, %v1515
  %v1676 = vpack.c.b16 %v1520, %v1516
  %v1677 = vpack.c.b16 %v1521, %v1517
  %v1678 = vpack.c.b16 %v1522, %v1518
  %v1679 = vpack.c.b16 %v1527, %v1523
  %v1680 = vpack.c.b16 %v1528, %v1524
  %v1681 = vpack.c.b16 %v1529, %v1525
  %v1682 = vpack.c.b16 %v1530, %v1526
  %v1683 = vpack.c.b16 %v1535, %v1531
  %v1684 = vpack.c.b16 %v1536, %v1532
  %v1685 = vpack.c.b16 %v1537, %v1533
  %v1686 = vpack.c.b16 %v1538, %v1534
  %v1687 = vpack.c.b16 %v1543, %v1539
  %v1688 = vpack.c.b16 %v1544, %v1540
  %v1689 = vpack.c.b16 %v1545, %v1541
  %v1690 = vpack.c.b16 %v1546, %v1542
  %v1691 = vpack.c.b16 %v1551, %v1547
  %v1692 = vpack.c.b16 %v1552, %v1548
  %v1693 = vpack.c.b16 %v1553, %v1549
  %v1694 = vpack.c.b16 %v1554, %v1550
  %v1695 = vpack.c.b16 %v1559, %v1555
  %v1696 = vpack.c.b16 %v1560, %v1556
  %v1697 = vpack.c.b16 %v1561, %v1557
  %v1698 = vpack.c.b16 %v1562, %v1558
  %v1699 = vpack.c.b16 %v1567, %v1563
  %v1700 = vpack.c.b16 %v1568, %v1564
  %v1701 = vpack.c.b16 %v1569, %v1565
  %v1702 = vpack.c.b16 %v1570, %v1566
  %v1703 = vpack.c.b16 %v1575, %v1571
  %v1704 = vpack.c.b16 %v1576, %v1572
  %v1705 = vpack.c.b16 %v1577, %v1573
  %v1706 = vpack.c.b16 %v1578, %v1574
  %1835 = vmatprep.subr.bf16.mxu0 %v1608
  %1836 = vmatpush1.bf16.msra.mxu0 %v1607
  %1837 = vmatprep.subr.bf16.mxu0 %v1604
  %1838 = vmatpush1.bf16.msra.mxu0 %v1603
  %1839 = vmatprep.subr.bf16.mxu0 %v1600
  %1840 = vmatpush1.bf16.msra.mxu0 %v1599
  %1841 = vmatprep.subr.bf16.mxu0 %v1596
  %1842 = vmatpush1.bf16.msra.mxu0 %v1595
  %1843 = vmatprep.subr.bf16.mxu0 %v1592
  %1844 = vmatpush1.bf16.msra.mxu0 %v1591
  %1845 = vmatprep.subr.bf16.mxu0 %v1588
  %1846 = vmatpush1.bf16.msra.mxu0 %v1587
  %1847 = vmatprep.subr.bf16.mxu0 %v1584
  %1848 = vmatpush1.bf16.msra.mxu0 %v1583
  %1849 = vmatprep.subr.bf16.mxu0 %v1580
  %1850 = vmatpush1.bf16.msra.mxu0 %v1579
  %1851 = vmatprep.subr.bf16.mxu0 %v1640
  %1852 = vmatpush2.bf16.msra.mxu0 %v1639
  %1853 = vmatprep.subr.bf16.mxu0 %v1636
  %1854 = vmatpush2.bf16.msra.mxu0 %v1635
  %1855 = vmatprep.subr.bf16.mxu0 %v1632
  %1856 = vmatpush2.bf16.msra.mxu0 %v1631
  %1857 = vmatprep.subr.bf16.mxu0 %v1628
  %1858 = vmatpush2.bf16.msra.mxu0 %v1627
  %1859 = vmatprep.subr.bf16.mxu0 %v1624
  %1860 = vmatpush2.bf16.msra.mxu0 %v1623
  %1861 = vmatprep.subr.bf16.mxu0 %v1620
  %1862 = vmatpush2.bf16.msra.mxu0 %v1619
  %1863 = vmatprep.subr.bf16.mxu0 %v1616
  %1864 = vmatpush2.bf16.msra.mxu0 %v1615
  %1865 = vmatprep.subr.bf16.mxu0 %v1612
  %1866 = vmatpush2.bf16.msra.mxu0 %v1611
  %1867 = vmatprep.mubr.bf16.mxu0 %v1030
  %1868 = vmatmul.mubr.bf16.gmra.mxu0 %v1029
  %v1869 = vpop.f32.mrf.mxu0
  %v1870 = vadd.f32 %v1178, %v1869
  %v1871 = vpop.f32.mrf.mxu0
  %v1872 = vadd.f32 %v1182, %v1871
  %v1873 = vpop.f32.mrf.mxu0
  %v1874 = vadd.f32 %v1178, %v1873
  %v1875 = vpop.f32.mrf.mxu0
  %v1876 = vadd.f32 %v1182, %v1875
  %1877 = vmatprep.mubr.bf16.mxu0 %v1034
  %1878 = vmatmul.mubr.bf16.gmra.mxu0 %v1033
  %v1879 = vpop.f32.mrf.mxu0
  %v1880 = vadd.f32 %v1178, %v1879
  %v1881 = vpop.f32.mrf.mxu0
  %v1882 = vadd.f32 %v1182, %v1881
  %v1883 = vpop.f32.mrf.mxu0
  %v1884 = vadd.f32 %v1178, %v1883
  %v1885 = vpop.f32.mrf.mxu0
  %v1886 = vadd.f32 %v1182, %v1885
  %1887 = vmatprep.mubr.bf16.mxu0 %v1038
  %1888 = vmatmul.mubr.bf16.gmra.mxu0 %v1037
  %v1889 = vpop.f32.mrf.mxu0
  %v1890 = vadd.f32 %v1178, %v1889
  %v1891 = vpop.f32.mrf.mxu0
  %v1892 = vadd.f32 %v1182, %v1891
  %v1893 = vpop.f32.mrf.mxu0
  %v1894 = vadd.f32 %v1178, %v1893
  %v1895 = vpop.f32.mrf.mxu0
  %v1896 = vadd.f32 %v1182, %v1895
  %1897 = vmatprep.mubr.bf16.mxu0 %v1042
  %1898 = vmatmul.mubr.bf16.gmra.mxu0 %v1041
  %v1899 = vpop.f32.mrf.mxu0
  %v1900 = vadd.f32 %v1178, %v1899
  %v1901 = vpop.f32.mrf.mxu0
  %v1902 = vadd.f32 %v1182, %v1901
  %v1903 = vpop.f32.mrf.mxu0
  %v1904 = vadd.f32 %v1178, %v1903
  %v1905 = vpop.f32.mrf.mxu0
  %v1906 = vadd.f32 %v1182, %v1905
  %1907 = vdwg.mxu0
  %1908 = vmatprep.subr.bf16.mxu0 %v1672
  %1909 = vmatpush1.bf16.msra.mxu0 %v1671
  %1910 = vmatprep.subr.bf16.mxu0 %v1668
  %1911 = vmatpush1.bf16.msra.mxu0 %v1667
  %1912 = vmatprep.subr.bf16.mxu0 %v1664
  %1913 = vmatpush1.bf16.msra.mxu0 %v1663
  %1914 = vmatprep.subr.bf16.mxu0 %v1660
  %1915 = vmatpush1.bf16.msra.mxu0 %v1659
  %1916 = vmatprep.subr.bf16.mxu0 %v1656
  %1917 = vmatpush1.bf16.msra.mxu0 %v1655
  %1918 = vmatprep.subr.bf16.mxu0 %v1652
  %1919 = vmatpush1.bf16.msra.mxu0 %v1651
  %1920 = vmatprep.subr.bf16.mxu0 %v1648
  %1921 = vmatpush1.bf16.msra.mxu0 %v1647
  %1922 = vmatprep.subr.bf16.mxu0 %v1644
  %1923 = vmatpush1.bf16.msra.mxu0 %v1643
  %1924 = vmatprep.subr.bf16.mxu0 %v1704
  %1925 = vmatpush2.bf16.msra.mxu0 %v1703
  %1926 = vmatprep.subr.bf16.mxu0 %v1700
  %1927 = vmatpush2.bf16.msra.mxu0 %v1699
  %1928 = vmatprep.subr.bf16.mxu0 %v1696
  %1929 = vmatpush2.bf16.msra.mxu0 %v1695
  %1930 = vmatprep.subr.bf16.mxu0 %v1692
  %1931 = vmatpush2.bf16.msra.mxu0 %v1691
  %1932 = vmatprep.subr.bf16.mxu0 %v1688
  %1933 = vmatpush2.bf16.msra.mxu0 %v1687
  %1934 = vmatprep.subr.bf16.mxu0 %v1684
  %1935 = vmatpush2.bf16.msra.mxu0 %v1683
  %1936 = vmatprep.subr.bf16.mxu0 %v1680
  %1937 = vmatpush2.bf16.msra.mxu0 %v1679
  %1938 = vmatprep.subr.bf16.mxu0 %v1676
  %1939 = vmatpush2.bf16.msra.mxu0 %v1675
  %1940 = vmatprep.mubr.bf16.mxu0 %v1032
  %1941 = vmatmul.mubr.bf16.gmra.mxu0 %v1031
  %v1942 = vpop.f32.mrf.mxu0
  %v1943 = vadd.f32 %v1870, %v1942
  %v1944 = vpop.f32.mrf.mxu0
  %v1945 = vadd.f32 %v1872, %v1944
  %v1946 = vpop.f32.mrf.mxu0
  %v1947 = vadd.f32 %v1874, %v1946
  %v1948 = vpop.f32.mrf.mxu0
  %v1949 = vadd.f32 %v1876, %v1948
  %1950 = vmatprep.mubr.bf16.mxu0 %v1036
  %1951 = vmatmul.mubr.bf16.gmra.mxu0 %v1035
  %v1952 = vpop.f32.mrf.mxu0
  %v1953 = vadd.f32 %v1880, %v1952
  %v1954 = vpop.f32.mrf.mxu0
  %v1955 = vadd.f32 %v1882, %v1954
  %v1956 = vpop.f32.mrf.mxu0
  %v1957 = vadd.f32 %v1884, %v1956
  %v1958 = vpop.f32.mrf.mxu0
  %v1959 = vadd.f32 %v1886, %v1958
  %1960 = vmatprep.mubr.bf16.mxu0 %v1040
  %1961 = vmatmul.mubr.bf16.gmra.mxu0 %v1039
  %v1962 = vpop.f32.mrf.mxu0
  %v1963 = vadd.f32 %v1890, %v1962
  %v1964 = vpop.f32.mrf.mxu0
  %v1965 = vadd.f32 %v1892, %v1964
  %v1966 = vpop.f32.mrf.mxu0
  %v1967 = vadd.f32 %v1894, %v1966
  %v1968 = vpop.f32.mrf.mxu0
  %v1969 = vadd.f32 %v1896, %v1968
  %1970 = vmatprep.mubr.bf16.mxu0 %v1044
  %1971 = vmatmul.mubr.bf16.gmra.mxu0 %v1043
  %v1972 = vpop.f32.mrf.mxu0
  %v1973 = vadd.f32 %v1900, %v1972
  %v1974 = vpop.f32.mrf.mxu0
  %v1975 = vadd.f32 %v1902, %v1974
  %v1976 = vpop.f32.mrf.mxu0
  %v1977 = vadd.f32 %v1904, %v1976
  %v1978 = vpop.f32.mrf.mxu0
  %v1979 = vadd.f32 %v1906, %v1978
  %1980 = vdwg.mxu0
  %1981 = vmatprep.subr.bf16.mxu0 %v1610
  %1982 = vmatpush1.bf16.msra.mxu0 %v1609
  %1983 = vmatprep.subr.bf16.mxu0 %v1606
  %1984 = vmatpush1.bf16.msra.mxu0 %v1605
  %1985 = vmatprep.subr.bf16.mxu0 %v1602
  %1986 = vmatpush1.bf16.msra.mxu0 %v1601
  %1987 = vmatprep.subr.bf16.mxu0 %v1598
  %1988 = vmatpush1.bf16.msra.mxu0 %v1597
  %1989 = vmatprep.subr.bf16.mxu0 %v1594
  %1990 = vmatpush1.bf16.msra.mxu0 %v1593
  %1991 = vmatprep.subr.bf16.mxu0 %v1590
  %1992 = vmatpush1.bf16.msra.mxu0 %v1589
  %1993 = vmatprep.subr.bf16.mxu0 %v1586
  %1994 = vmatpush1.bf16.msra.mxu0 %v1585
  %1995 = vmatprep.subr.bf16.mxu0 %v1582
  %1996 = vmatpush1.bf16.msra.mxu0 %v1581
  %1997 = vmatprep.subr.bf16.mxu0 %v1642
  %1998 = vmatpush2.bf16.msra.mxu0 %v1641
  %1999 = vmatprep.subr.bf16.mxu0 %v1638
  %2000 = vmatpush2.bf16.msra.mxu0 %v1637
  %2001 = vmatprep.subr.bf16.mxu0 %v1634
  %2002 = vmatpush2.bf16.msra.mxu0 %v1633
  %2003 = vmatprep.subr.bf16.mxu0 %v1630
  %2004 = vmatpush2.bf16.msra.mxu0 %v1629
  %2005 = vmatprep.subr.bf16.mxu0 %v1626
  %2006 = vmatpush2.bf16.msra.mxu0 %v1625
  %2007 = vmatprep.subr.bf16.mxu0 %v1622
  %2008 = vmatpush2.bf16.msra.mxu0 %v1621
  %2009 = vmatprep.subr.bf16.mxu0 %v1618
  %2010 = vmatpush2.bf16.msra.mxu0 %v1617
  %2011 = vmatprep.subr.bf16.mxu0 %v1614
  %2012 = vmatpush2.bf16.msra.mxu0 %v1613
  %2013 = vmatprep.mubr.bf16.mxu0 %v1030
  %2014 = vmatmul.mubr.bf16.gmra.mxu0 %v1029
  %v2015 = vpop.f32.mrf.mxu0
  %v2016 = vadd.f32 %v1186, %v2015
  %v2017 = vpop.f32.mrf.mxu0
  %v2018 = vadd.f32 %v1190, %v2017
  %v2019 = vpop.f32.mrf.mxu0
  %v2020 = vadd.f32 %v1186, %v2019
  %v2021 = vpop.f32.mrf.mxu0
  %v2022 = vadd.f32 %v1190, %v2021
  %2023 = vmatprep.mubr.bf16.mxu0 %v1034
  %2024 = vmatmul.mubr.bf16.gmra.mxu0 %v1033
  %v2025 = vpop.f32.mrf.mxu0
  %v2026 = vadd.f32 %v1186, %v2025
  %v2027 = vpop.f32.mrf.mxu0
  %v2028 = vadd.f32 %v1190, %v2027
  %v2029 = vpop.f32.mrf.mxu0
  %v2030 = vadd.f32 %v1186, %v2029
  %v2031 = vpop.f32.mrf.mxu0
  %v2032 = vadd.f32 %v1190, %v2031
  %2033 = vmatprep.mubr.bf16.mxu0 %v1038
  %2034 = vmatmul.mubr.bf16.gmra.mxu0 %v1037
  %v2035 = vpop.f32.mrf.mxu0
  %v2036 = vadd.f32 %v1186, %v2035
  %v2037 = vpop.f32.mrf.mxu0
  %v2038 = vadd.f32 %v1190, %v2037
  %v2039 = vpop.f32.mrf.mxu0
  %v2040 = vadd.f32 %v1186, %v2039
  %v2041 = vpop.f32.mrf.mxu0
  %v2042 = vadd.f32 %v1190, %v2041
  %2043 = vmatprep.mubr.bf16.mxu0 %v1042
  %2044 = vmatmul.mubr.bf16.gmra.mxu0 %v1041
  %v2045 = vpop.f32.mrf.mxu0
  %v2046 = vadd.f32 %v1186, %v2045
  %v2047 = vpop.f32.mrf.mxu0
  %v2048 = vadd.f32 %v1190, %v2047
  %v2049 = vpop.f32.mrf.mxu0
  %v2050 = vadd.f32 %v1186, %v2049
  %v2051 = vpop.f32.mrf.mxu0
  %v2052 = vadd.f32 %v1190, %v2051
  %2053 = vdwg.mxu0
  %2054 = vmatprep.subr.bf16.mxu0 %v1674
  %2055 = vmatpush1.bf16.msra.mxu0 %v1673
  %2056 = vmatprep.subr.bf16.mxu0 %v1670
  %2057 = vmatpush1.bf16.msra.mxu0 %v1669
  %2058 = vmatprep.subr.bf16.mxu0 %v1666
  %2059 = vmatpush1.bf16.msra.mxu0 %v1665
  %2060 = vmatprep.subr.bf16.mxu0 %v1662
  %2061 = vmatpush1.bf16.msra.mxu0 %v1661
  %2062 = vmatprep.subr.bf16.mxu0 %v1658
  %2063 = vmatpush1.bf16.msra.mxu0 %v1657
  %2064 = vmatprep.subr.bf16.mxu0 %v1654
  %2065 = vmatpush1.bf16.msra.mxu0 %v1653
  %2066 = vmatprep.subr.bf16.mxu0 %v1650
  %2067 = vmatpush1.bf16.msra.mxu0 %v1649
  %2068 = vmatprep.subr.bf16.mxu0 %v1646
  %2069 = vmatpush1.bf16.msra.mxu0 %v1645
  %2070 = vmatprep.subr.bf16.mxu0 %v1706
  %2071 = vmatpush2.bf16.msra.mxu0 %v1705
  %2072 = vmatprep.subr.bf16.mxu0 %v1702
  %2073 = vmatpush2.bf16.msra.mxu0 %v1701
  %2074 = vmatprep.subr.bf16.mxu0 %v1698
  %2075 = vmatpush2.bf16.msra.mxu0 %v1697
  %2076 = vmatprep.subr.bf16.mxu0 %v1694
  %2077 = vmatpush2.bf16.msra.mxu0 %v1693
  %2078 = vmatprep.subr.bf16.mxu0 %v1690
  %2079 = vmatpush2.bf16.msra.mxu0 %v1689
  %2080 = vmatprep.subr.bf16.mxu0 %v1686
  %2081 = vmatpush2.bf16.msra.mxu0 %v1685
  %2082 = vmatprep.subr.bf16.mxu0 %v1682
  %2083 = vmatpush2.bf16.msra.mxu0 %v1681
  %2084 = vmatprep.subr.bf16.mxu0 %v1678
  %2085 = vmatpush2.bf16.msra.mxu0 %v1677
  %2086 = vmatprep.mubr.bf16.mxu0 %v1032
  %2087 = vmatmul.mubr.bf16.gmra.mxu0 %v1031
  %v2088 = vpop.f32.mrf.mxu0
  %v2089 = vadd.f32 %v2016, %v2088
  %v2090 = vpop.f32.mrf.mxu0
  %v2091 = vadd.f32 %v2018, %v2090
  %v2092 = vpop.f32.mrf.mxu0
  %v2093 = vadd.f32 %v2020, %v2092
  %v2094 = vpop.f32.mrf.mxu0
  %v2095 = vadd.f32 %v2022, %v2094
  %2096 = vmatprep.mubr.bf16.mxu0 %v1036
  %2097 = vmatmul.mubr.bf16.gmra.mxu0 %v1035
  %v2098 = vpop.f32.mrf.mxu0
  %v2099 = vadd.f32 %v2026, %v2098
  %v2100 = vpop.f32.mrf.mxu0
  %v2101 = vadd.f32 %v2028, %v2100
  %v2102 = vpop.f32.mrf.mxu0
  %v2103 = vadd.f32 %v2030, %v2102
  %v2104 = vpop.f32.mrf.mxu0
  %v2105 = vadd.f32 %v2032, %v2104
  %2106 = vmatprep.mubr.bf16.mxu0 %v1040
  %2107 = vmatmul.mubr.bf16.gmra.mxu0 %v1039
  %v2108 = vpop.f32.mrf.mxu0
  %v2109 = vadd.f32 %v2036, %v2108
  %v2110 = vpop.f32.mrf.mxu0
  %v2111 = vadd.f32 %v2038, %v2110
  %v2112 = vpop.f32.mrf.mxu0
  %v2113 = vadd.f32 %v2040, %v2112
  %v2114 = vpop.f32.mrf.mxu0
  %v2115 = vadd.f32 %v2042, %v2114
  %2116 = vmatprep.mubr.bf16.mxu0 %v1044
  %2117 = vmatmul.mubr.bf16.gmra.mxu0 %v1043
  %v2118 = vpop.f32.mrf.mxu0
  %v2119 = vadd.f32 %v2046, %v2118
  %v2120 = vpop.f32.mrf.mxu0
  %v2121 = vadd.f32 %v2048, %v2120
  %v2122 = vpop.f32.mrf.mxu0
  %v2123 = vadd.f32 %v2050, %v2122
  %v2124 = vpop.f32.mrf.mxu0
  %v2125 = vadd.f32 %v2052, %v2124
  %2126 = vdwg.mxu0
  %v2127 = vmax.f32 %v1943, 0.0
  %v2128 = vmax.f32 %v1945, 0.0
  %v2129 = vmax.f32 %v2089, 0.0
  %v2130 = vmax.f32 %v2091, 0.0
  %v2131 = vmax.f32 %v1947, 0.0
  %v2132 = vmax.f32 %v1949, 0.0
  %v2133 = vmax.f32 %v2093, 0.0
  %v2134 = vmax.f32 %v2095, 0.0
  %v2135 = vmax.f32 %v1953, 0.0
  %v2136 = vmax.f32 %v1955, 0.0
  %v2137 = vmax.f32 %v2099, 0.0
  %v2138 = vmax.f32 %v2101, 0.0
  %v2139 = vmax.f32 %v1957, 0.0
  %v2140 = vmax.f32 %v1959, 0.0
  %v2141 = vmax.f32 %v2103, 0.0
  %v2142 = vmax.f32 %v2105, 0.0
  %v2143 = vmax.f32 %v1963, 0.0
  %v2144 = vmax.f32 %v1965, 0.0
  %v2145 = vmax.f32 %v2109, 0.0
  %v2146 = vmax.f32 %v2111, 0.0
  %v2147 = vmax.f32 %v1967, 0.0
  %v2148 = vmax.f32 %v1969, 0.0
  %v2149 = vmax.f32 %v2113, 0.0
  %v2150 = vmax.f32 %v2115, 0.0
  %v2151 = vmax.f32 %v1973, 0.0
  %v2152 = vmax.f32 %v1975, 0.0
  %v2153 = vmax.f32 %v2119, 0.0
  %v2154 = vmax.f32 %v2121, 0.0
  %v2155 = vmax.f32 %v1977, 0.0
  %v2156 = vmax.f32 %v1979, 0.0
  %v2157 = vmax.f32 %v2123, 0.0
  %v2158 = vmax.f32 %v2125, 0.0
  %v2159 = vpack.c.bf16 %v2131, %v2127
  %v2160 = vpack.c.bf16 %v2132, %v2128
  %v2161 = vpack.c.bf16 %v2133, %v2129
  %v2162 = vpack.c.bf16 %v2134, %v2130
  %v2163 = vpack.c.bf16 %v2139, %v2135
  %v2164 = vpack.c.bf16 %v2140, %v2136
  %v2165 = vpack.c.bf16 %v2141, %v2137
  %v2166 = vpack.c.bf16 %v2142, %v2138
  %v2167 = vpack.c.bf16 %v2147, %v2143
  %v2168 = vpack.c.bf16 %v2148, %v2144
  %v2169 = vpack.c.bf16 %v2149, %v2145
  %v2170 = vpack.c.bf16 %v2150, %v2146
  %v2171 = vpack.c.bf16 %v2155, %v2151
  %v2172 = vpack.c.bf16 %v2156, %v2152
  %v2173 = vpack.c.bf16 %v2157, %v2153
  %v2174 = vpack.c.bf16 %v2158, %v2154
  %v2175 = vld [vmem:[%s5] sm:$0xf]
  %v2176 = vld [vmem:[%s5 + $0x4] sm:$0xf]
  %v2177 = vld [vmem:[%s5 + $0x8] sm:$0xf]
  %v2178 = vld [vmem:[%s5 + $0xc] sm:$0xf]
  %v2179 = vld [vmem:[%s5 + $0x10] sm:$0xf]
  %v2180 = vld [vmem:[%s5 + $0x14] sm:$0xf]
  %v2181 = vld [vmem:[%s5 + $0x18] sm:$0xf]
  %v2182 = vld [vmem:[%s5 + $0x1c] sm:$0xf]
  %v2183 = vld [vmem:[%s5 + $0x20] sm:$0xf]
  %v2184 = vld [vmem:[%s5 + $0x24] sm:$0xf]
  %v2185 = vld [vmem:[%s5 + $0x28] sm:$0xf]
  %v2186 = vld [vmem:[%s5 + $0x2c] sm:$0xf]
  %v2187 = vld [vmem:[%s5 + $0x30] sm:$0xf]
  %v2188 = vld [vmem:[%s5 + $0x34] sm:$0xf]
  %v2189 = vld [vmem:[%s5 + $0x38] sm:$0xf]
  %v2190 = vld [vmem:[%s5 + $0x3c] sm:$0xf]
  %v2191 = vld [vmem:[%s5 + $0x40] sm:$0xf]
  %v2192 = vld [vmem:[%s5 + $0x44] sm:$0xf]
  %v2193 = vld [vmem:[%s5 + $0x48] sm:$0xf]
  %v2194 = vld [vmem:[%s5 + $0x4c] sm:$0xf]
  %v2195 = vld [vmem:[%s5 + $0x50] sm:$0xf]
  %v2196 = vld [vmem:[%s5 + $0x54] sm:$0xf]
  %v2197 = vld [vmem:[%s5 + $0x58] sm:$0xf]
  %v2198 = vld [vmem:[%s5 + $0x5c] sm:$0xf]
  %v2199 = vld [vmem:[%s5 + $0x60] sm:$0xf]
  %v2200 = vld [vmem:[%s5 + $0x64] sm:$0xf]
  %v2201 = vld [vmem:[%s5 + $0x68] sm:$0xf]
  %v2202 = vld [vmem:[%s5 + $0x6c] sm:$0xf]
  %v2203 = vld [vmem:[%s5 + $0x70] sm:$0xf]
  %v2204 = vld [vmem:[%s5 + $0x74] sm:$0xf]
  %v2205 = vld [vmem:[%s5 + $0x78] sm:$0xf]
  %v2206 = vld [vmem:[%s5 + $0x7c] sm:$0xf]
  %v2207 = vld [vmem:[%s5 + $0x80] sm:$0xf]
  %v2208 = vld [vmem:[%s5 + $0x84] sm:$0xf]
  %v2209 = vld [vmem:[%s5 + $0x88] sm:$0xf]
  %v2210 = vld [vmem:[%s5 + $0x8c] sm:$0xf]
  %v2211 = vld [vmem:[%s5 + $0x90] sm:$0xf]
  %v2212 = vld [vmem:[%s5 + $0x94] sm:$0xf]
  %v2213 = vld [vmem:[%s5 + $0x98] sm:$0xf]
  %v2214 = vld [vmem:[%s5 + $0x9c] sm:$0xf]
  %v2215 = vld [vmem:[%s5 + $0xa0] sm:$0xf]
  %v2216 = vld [vmem:[%s5 + $0xa4] sm:$0xf]
  %v2217 = vld [vmem:[%s5 + $0xa8] sm:$0xf]
  %v2218 = vld [vmem:[%s5 + $0xac] sm:$0xf]
  %v2219 = vld [vmem:[%s5 + $0xb0] sm:$0xf]
  %v2220 = vld [vmem:[%s5 + $0xb4] sm:$0xf]
  %v2221 = vld [vmem:[%s5 + $0xb8] sm:$0xf]
  %v2222 = vld [vmem:[%s5 + $0xbc] sm:$0xf]
  %v2223 = vld [vmem:[%s5 + $0xc0] sm:$0xf]
  %v2224 = vld [vmem:[%s5 + $0xc4] sm:$0xf]
  %v2225 = vld [vmem:[%s5 + $0xc8] sm:$0xf]
  %v2226 = vld [vmem:[%s5 + $0xcc] sm:$0xf]
  %v2227 = vld [vmem:[%s5 + $0xd0] sm:$0xf]
  %v2228 = vld [vmem:[%s5 + $0xd4] sm:$0xf]
  %v2229 = vld [vmem:[%s5 + $0xd8] sm:$0xf]
  %v2230 = vld [vmem:[%s5 + $0xdc] sm:$0xf]
  %v2231 = vld [vmem:[%s5 + $0xe0] sm:$0xf]
  %v2232 = vld [vmem:[%s5 + $0xe4] sm:$0xf]
  %v2233 = vld [vmem:[%s5 + $0xe8] sm:$0xf]
  %v2234 = vld [vmem:[%s5 + $0xec] sm:$0xf]
  %v2235 = vld [vmem:[%s5 + $0xf0] sm:$0xf]
  %v2236 = vld [vmem:[%s5 + $0xf4] sm:$0xf]
  %v2237 = vld [vmem:[%s5 + $0xf8] sm:$0xf]
  %v2238 = vld [vmem:[%s5 + $0xfc] sm:$0xf]
  %v2239 = vld [vmem:[%s6] sm:$0x1]
  %v2241 = vlaneseq
  %v2242 = vshrl.u32 %v2241, 7
  %v2243 = vsub.s32 0, %v2242
  %v2244 = vrot.slane %v2239, %v2243
  %v2310 = vunpack.c.l.b16 %v2175
  %v2311 = vunpack.c.l.b16 %v2176
  %v2312 = vunpack.c.l.b16 %v2177
  %v2313 = vunpack.c.l.b16 %v2178
  %v2314 = vunpack.c.l.b16 %v2179
  %v2315 = vunpack.c.l.b16 %v2180
  %v2316 = vunpack.c.l.b16 %v2181
  %v2317 = vunpack.c.l.b16 %v2182
  %v2318 = vunpack.c.l.b16 %v2183
  %v2319 = vunpack.c.l.b16 %v2184
  %v2320 = vunpack.c.l.b16 %v2185
  %v2321 = vunpack.c.l.b16 %v2186
  %v2322 = vunpack.c.l.b16 %v2187
  %v2323 = vunpack.c.l.b16 %v2188
  %v2324 = vunpack.c.l.b16 %v2189
  %v2325 = vunpack.c.l.b16 %v2190
  %v2326 = vunpack.c.l.b16 %v2191
  %v2327 = vunpack.c.l.b16 %v2192
  %v2328 = vunpack.c.l.b16 %v2193
  %v2329 = vunpack.c.l.b16 %v2194
  %v2330 = vunpack.c.l.b16 %v2195
  %v2331 = vunpack.c.l.b16 %v2196
  %v2332 = vunpack.c.l.b16 %v2197
  %v2333 = vunpack.c.l.b16 %v2198
  %v2334 = vunpack.c.l.b16 %v2199
  %v2335 = vunpack.c.l.b16 %v2200
  %v2336 = vunpack.c.l.b16 %v2201
  %v2337 = vunpack.c.l.b16 %v2202
  %v2338 = vunpack.c.l.b16 %v2203
  %v2339 = vunpack.c.l.b16 %v2204
  %v2340 = vunpack.c.l.b16 %v2205
  %v2341 = vunpack.c.l.b16 %v2206
  %v2342 = vunpack.c.l.b16 %v2207
  %v2343 = vunpack.c.l.b16 %v2208
  %v2344 = vunpack.c.l.b16 %v2209
  %v2345 = vunpack.c.l.b16 %v2210
  %v2346 = vunpack.c.l.b16 %v2211
  %v2347 = vunpack.c.l.b16 %v2212
  %v2348 = vunpack.c.l.b16 %v2213
  %v2349 = vunpack.c.l.b16 %v2214
  %v2350 = vunpack.c.l.b16 %v2215
  %v2351 = vunpack.c.l.b16 %v2216
  %v2352 = vunpack.c.l.b16 %v2217
  %v2353 = vunpack.c.l.b16 %v2218
  %v2354 = vunpack.c.l.b16 %v2219
  %v2355 = vunpack.c.l.b16 %v2220
  %v2356 = vunpack.c.l.b16 %v2221
  %v2357 = vunpack.c.l.b16 %v2222
  %v2358 = vunpack.c.l.b16 %v2223
  %v2359 = vunpack.c.l.b16 %v2224
  %v2360 = vunpack.c.l.b16 %v2225
  %v2361 = vunpack.c.l.b16 %v2226
  %v2362 = vunpack.c.l.b16 %v2227
  %v2363 = vunpack.c.l.b16 %v2228
  %v2364 = vunpack.c.l.b16 %v2229
  %v2365 = vunpack.c.l.b16 %v2230
  %v2366 = vunpack.c.l.b16 %v2231
  %v2367 = vunpack.c.l.b16 %v2232
  %v2368 = vunpack.c.l.b16 %v2233
  %v2369 = vunpack.c.l.b16 %v2234
  %v2370 = vunpack.c.l.b16 %v2235
  %v2371 = vunpack.c.l.b16 %v2236
  %v2372 = vunpack.c.l.b16 %v2237
  %v2373 = vunpack.c.l.b16 %v2238
  %v2374 = vpack.c.b16 %v2311, %v2310
  %v2375 = vpack.c.b16 %v2313, %v2312
  %v2376 = vpack.c.b16 %v2315, %v2314
  %v2377 = vpack.c.b16 %v2317, %v2316
  %v2378 = vpack.c.b16 %v2319, %v2318
  %v2379 = vpack.c.b16 %v2321, %v2320
  %v2380 = vpack.c.b16 %v2323, %v2322
  %v2381 = vpack.c.b16 %v2325, %v2324
  %v2382 = vpack.c.b16 %v2327, %v2326
  %v2383 = vpack.c.b16 %v2329, %v2328
  %v2384 = vpack.c.b16 %v2331, %v2330
  %v2385 = vpack.c.b16 %v2333, %v2332
  %v2386 = vpack.c.b16 %v2335, %v2334
  %v2387 = vpack.c.b16 %v2337, %v2336
  %v2388 = vpack.c.b16 %v2339, %v2338
  %v2389 = vpack.c.b16 %v2341, %v2340
  %v2390 = vpack.c.b16 %v2343, %v2342
  %v2391 = vpack.c.b16 %v2345, %v2344
  %v2392 = vpack.c.b16 %v2347, %v2346
  %v2393 = vpack.c.b16 %v2349, %v2348
  %v2394 = vpack.c.b16 %v2351, %v2350
  %v2395 = vpack.c.b16 %v2353, %v2352
  %v2396 = vpack.c.b16 %v2355, %v2354
  %v2397 = vpack.c.b16 %v2357, %v2356
  %v2398 = vpack.c.b16 %v2359, %v2358
  %v2399 = vpack.c.b16 %v2361, %v2360
  %v2400 = vpack.c.b16 %v2363, %v2362
  %v2401 = vpack.c.b16 %v2365, %v2364
  %v2402 = vpack.c.b16 %v2367, %v2366
  %v2403 = vpack.c.b16 %v2369, %v2368
  %v2404 = vpack.c.b16 %v2371, %v2370
  %v2405 = vpack.c.b16 %v2373, %v2372
  %2438 = vmatprep.subr.bf16.mxu0 0
  %2439 = vmatpush1.bf16.msra.mxu0 %v2381
  %2440 = vmatprep.subr.bf16.mxu0 0
  %2441 = vmatpush1.bf16.msra.mxu0 %v2380
  %2442 = vmatprep.subr.bf16.mxu0 0
  %2443 = vmatpush1.bf16.msra.mxu0 %v2379
  %2444 = vmatprep.subr.bf16.mxu0 0
  %2445 = vmatpush1.bf16.msra.mxu0 %v2378
  %2446 = vmatprep.subr.bf16.mxu0 0
  %2447 = vmatpush1.bf16.msra.mxu0 %v2377
  %2448 = vmatprep.subr.bf16.mxu0 0
  %2449 = vmatpush1.bf16.msra.mxu0 %v2376
  %2450 = vmatprep.subr.bf16.mxu0 0
  %2451 = vmatpush1.bf16.msra.mxu0 %v2375
  %2452 = vmatprep.subr.bf16.mxu0 0
  %2453 = vmatpush1.bf16.msra.mxu0 %v2374
  %2454 = vmatprep.subr.bf16.mxu0 0
  %2455 = vmatpush2.bf16.msra.mxu0 %v2389
  %2456 = vmatprep.subr.bf16.mxu0 0
  %2457 = vmatpush2.bf16.msra.mxu0 %v2388
  %2458 = vmatprep.subr.bf16.mxu0 0
  %2459 = vmatpush2.bf16.msra.mxu0 %v2387
  %2460 = vmatprep.subr.bf16.mxu0 0
  %2461 = vmatpush2.bf16.msra.mxu0 %v2386
  %2462 = vmatprep.subr.bf16.mxu0 0
  %2463 = vmatpush2.bf16.msra.mxu0 %v2385
  %2464 = vmatprep.subr.bf16.mxu0 0
  %2465 = vmatpush2.bf16.msra.mxu0 %v2384
  %2466 = vmatprep.subr.bf16.mxu0 0
  %2467 = vmatpush2.bf16.msra.mxu0 %v2383
  %2468 = vmatprep.subr.bf16.mxu0 0
  %2469 = vmatpush2.bf16.msra.mxu0 %v2382
  %2470 = vmatprep.mubr.bf16.mxu0 %v2160
  %2471 = vmatmul.mubr.bf16.gmra.mxu0 %v2159
  %v2472 = vpop.f32.mrf.mxu0
  %v2473 = vadd.f32 %v2244, %v2472
  %v2474 = vpop.f32.mrf.mxu0
  %v2475 = vpop.f32.mrf.mxu0
  %v2476 = vadd.f32 %v2244, %v2475
  %v2477 = vpop.f32.mrf.mxu0
  %2478 = vmatprep.mubr.bf16.mxu0 %v2164
  %2479 = vmatmul.mubr.bf16.gmra.mxu0 %v2163
  %v2480 = vpop.f32.mrf.mxu0
  %v2481 = vadd.f32 %v2244, %v2480
  %v2482 = vpop.f32.mrf.mxu0
  %v2483 = vpop.f32.mrf.mxu0
  %v2484 = vadd.f32 %v2244, %v2483
  %v2485 = vpop.f32.mrf.mxu0
  %2486 = vmatprep.mubr.bf16.mxu0 %v2168
  %2487 = vmatmul.mubr.bf16.gmra.mxu0 %v2167
  %v2488 = vpop.f32.mrf.mxu0
  %v2489 = vadd.f32 %v2244, %v2488
  %v2490 = vpop.f32.mrf.mxu0
  %v2491 = vpop.f32.mrf.mxu0
  %v2492 = vadd.f32 %v2244, %v2491
  %v2493 = vpop.f32.mrf.mxu0
  %2494 = vmatprep.mubr.bf16.mxu0 %v2172
  %2495 = vmatmul.mubr.bf16.gmra.mxu0 %v2171
  %v2496 = vpop.f32.mrf.mxu0
  %v2497 = vadd.f32 %v2244, %v2496
  %v2498 = vpop.f32.mrf.mxu0
  %v2499 = vpop.f32.mrf.mxu0
  %v2500 = vadd.f32 %v2244, %v2499
  %v2501 = vpop.f32.mrf.mxu0
  %2502 = vdwg.mxu0
  %2503 = vmatprep.subr.bf16.mxu0 0
  %2504 = vmatpush1.bf16.msra.mxu0 %v2397
  %2505 = vmatprep.subr.bf16.mxu0 0
  %2506 = vmatpush1.bf16.msra.mxu0 %v2396
  %2507 = vmatprep.subr.bf16.mxu0 0
  %2508 = vmatpush1.bf16.msra.mxu0 %v2395
  %2509 = vmatprep.subr.bf16.mxu0 0
  %2510 = vmatpush1.bf16.msra.mxu0 %v2394
  %2511 = vmatprep.subr.bf16.mxu0 0
  %2512 = vmatpush1.bf16.msra.mxu0 %v2393
  %2513 = vmatprep.subr.bf16.mxu0 0
  %2514 = vmatpush1.bf16.msra.mxu0 %v2392
  %2515 = vmatprep.subr.bf16.mxu0 0
  %2516 = vmatpush1.bf16.msra.mxu0 %v2391
  %2517 = vmatprep.subr.bf16.mxu0 0
  %2518 = vmatpush1.bf16.msra.mxu0 %v2390
  %2519 = vmatprep.subr.bf16.mxu0 0
  %2520 = vmatpush2.bf16.msra.mxu0 %v2405
  %2521 = vmatprep.subr.bf16.mxu0 0
  %2522 = vmatpush2.bf16.msra.mxu0 %v2404
  %2523 = vmatprep.subr.bf16.mxu0 0
  %2524 = vmatpush2.bf16.msra.mxu0 %v2403
  %2525 = vmatprep.subr.bf16.mxu0 0
  %2526 = vmatpush2.bf16.msra.mxu0 %v2402
  %2527 = vmatprep.subr.bf16.mxu0 0
  %2528 = vmatpush2.bf16.msra.mxu0 %v2401
  %2529 = vmatprep.subr.bf16.mxu0 0
  %2530 = vmatpush2.bf16.msra.mxu0 %v2400
  %2531 = vmatprep.subr.bf16.mxu0 0
  %2532 = vmatpush2.bf16.msra.mxu0 %v2399
  %2533 = vmatprep.subr.bf16.mxu0 0
  %2534 = vmatpush2.bf16.msra.mxu0 %v2398
  %2535 = vmatprep.mubr.bf16.mxu0 %v2162
  %2536 = vmatmul.mubr.bf16.gmra.mxu0 %v2161
  %v2537 = vpop.f32.mrf.mxu0
  %v2538 = vadd.f32 %v2473, %v2537
  %v2539 = vpop.f32.mrf.mxu0
  %v2540 = vpop.f32.mrf.mxu0
  %v2541 = vadd.f32 %v2476, %v2540
  %v2542 = vpop.f32.mrf.mxu0
  %2543 = vmatprep.mubr.bf16.mxu0 %v2166
  %2544 = vmatmul.mubr.bf16.gmra.mxu0 %v2165
  %v2545 = vpop.f32.mrf.mxu0
  %v2546 = vadd.f32 %v2481, %v2545
  %v2547 = vpop.f32.mrf.mxu0
  %v2548 = vpop.f32.mrf.mxu0
  %v2549 = vadd.f32 %v2484, %v2548
  %v2550 = vpop.f32.mrf.mxu0
  %2551 = vmatprep.mubr.bf16.mxu0 %v2170
  %2552 = vmatmul.mubr.bf16.gmra.mxu0 %v2169
  %v2553 = vpop.f32.mrf.mxu0
  %v2554 = vadd.f32 %v2489, %v2553
  %v2555 = vpop.f32.mrf.mxu0
  %v2556 = vpop.f32.mrf.mxu0
  %v2557 = vadd.f32 %v2492, %v2556
  %v2558 = vpop.f32.mrf.mxu0
  %2559 = vmatprep.mubr.bf16.mxu0 %v2174
  %2560 = vmatmul.mubr.bf16.gmra.mxu0 %v2173
  %v2561 = vpop.f32.mrf.mxu0
  %v2562 = vadd.f32 %v2497, %v2561
  %v2563 = vpop.f32.mrf.mxu0
  %v2564 = vpop.f32.mrf.mxu0
  %v2565 = vadd.f32 %v2500, %v2564
  %v2566 = vpop.f32.mrf.mxu0
  %2567 = vdwg.mxu0
  %v2568 = vmax.f32 %v2538, 0.0
  %v2569 = vmax.f32 %v2541, 0.0
  %v2570 = vmax.f32 %v2546, 0.0
  %v2571 = vmax.f32 %v2549, 0.0
  %v2572 = vmax.f32 %v2554, 0.0
  %v2573 = vmax.f32 %v2557, 0.0
  %v2574 = vmax.f32 %v2562, 0.0
  %v2575 = vmax.f32 %v2565, 0.0
  %v2576 = vrot.slane %v2568, 4
  %v2577 = vadd.f32 %v2568, %v2576
  %v2578 = vrot.slane %v2577, 2
  %v2579 = vadd.f32 %v2577, %v2578
  %v2580 = vrot.slane %v2579, 1
  %v2581 = vadd.f32 %v2579, %v2580
  %v2582 = vrot.slane %v2569, 4
  %v2583 = vadd.f32 %v2569, %v2582
  %v2584 = vrot.slane %v2583, 2
  %v2585 = vadd.f32 %v2583, %v2584
  %v2586 = vrot.slane %v2585, 1
  %v2587 = vadd.f32 %v2585, %v2586
  %v2588 = vrot.slane %v2570, 4
  %v2589 = vadd.f32 %v2570, %v2588
  %v2590 = vrot.slane %v2589, 2
  %v2591 = vadd.f32 %v2589, %v2590
  %v2592 = vrot.slane %v2591, 1
  %v2593 = vadd.f32 %v2591, %v2592
  %v2594 = vrot.slane %v2571, 4
  %v2595 = vadd.f32 %v2571, %v2594
  %v2596 = vrot.slane %v2595, 2
  %v2597 = vadd.f32 %v2595, %v2596
  %v2598 = vrot.slane %v2597, 1
  %v2599 = vadd.f32 %v2597, %v2598
  %v2600 = vrot.slane %v2572, 4
  %v2601 = vadd.f32 %v2572, %v2600
  %v2602 = vrot.slane %v2601, 2
  %v2603 = vadd.f32 %v2601, %v2602
  %v2604 = vrot.slane %v2603, 1
  %v2605 = vadd.f32 %v2603, %v2604
  %v2606 = vrot.slane %v2573, 4
  %v2607 = vadd.f32 %v2573, %v2606
  %v2608 = vrot.slane %v2607, 2
  %v2609 = vadd.f32 %v2607, %v2608
  %v2610 = vrot.slane %v2609, 1
  %v2611 = vadd.f32 %v2609, %v2610
  %v2612 = vrot.slane %v2574, 4
  %v2613 = vadd.f32 %v2574, %v2612
  %v2614 = vrot.slane %v2613, 2
  %v2615 = vadd.f32 %v2613, %v2614
  %v2616 = vrot.slane %v2615, 1
  %v2617 = vadd.f32 %v2615, %v2616
  %v2618 = vrot.slane %v2575, 4
  %v2619 = vadd.f32 %v2575, %v2618
  %v2620 = vrot.slane %v2619, 2
  %v2621 = vadd.f32 %v2619, %v2620
  %v2622 = vrot.slane %v2621, 1
  %v2623 = vadd.f32 %v2621, %v2622
  %v2624 = vrcp.pop 8.0
  %v2625 = vmul.f32 %v2581, %v2624
  %v2626 = vmul.f32 %v2587, %v2624
  %v2627 = vmul.f32 %v2593, %v2624
  %v2628 = vmul.f32 %v2599, %v2624
  %v2629 = vmul.f32 %v2605, %v2624
  %v2630 = vmul.f32 %v2611, %v2624
  %v2631 = vmul.f32 %v2617, %v2624
  %v2632 = vmul.f32 %v2623, %v2624
  %vm2641 = vcmask 1041409
  %v2642 = vsel %vm2641, %v2626, %v2625
  %vm2643 = vcmask 1042434
  %v2644 = vsel %vm2643, %v2627, %v2642
  %vm2645 = vcmask 1043459
  %v2646 = vsel %vm2645, %v2628, %v2644
  %vm2647 = vcmask 1044484
  %v2648 = vsel %vm2647, %v2629, %v2646
  %vm2649 = vcmask 1045509
  %v2650 = vsel %vm2649, %v2630, %v2648
  %vm2651 = vcmask 1046534
  %v2652 = vsel %vm2651, %v2631, %v2650
  %vm2653 = vcmask 1047559
  %v2654 = vsel %vm2653, %v2632, %v2652
  %2656 = vst [vmem:[%s7] sm:$0xff] %v2654
  // Predicated region
  $region30: #{mlp_forward.1} parent=0 // pred_check
    _
  $region31: #{mlp_forward.1} parent=0 // pred_check_branch
    %2658 = sbr.rel (0) target = $region33
  $region32: #{mlp_forward.1} parent=0 // pred_region
    _
  $region33: #{mlp_forward.1} parent=0 // pred_fallthru
    _
  // Predicated region
  $region34: #{mlp_forward.1} parent=0 // pred_check
    _
  $region35: #{mlp_forward.1} parent=0 // pred_check_branch
    %2660 = sbr.rel (0) target = $region37
  $region36: #{mlp_forward.1} parent=0 // pred_region
    _
  $region37: #{mlp_forward.1} parent=0 // pred_fallthru
    _

</llo_original>
